<compile_context>
chip_gen: v7x
topology: tpu7x:2x2x1
jax: 0.10.0
libtpu: 0.0.40
codegen_flags: <defaults>
</compile_context>

<pallas_src>
import functools
import math

import jax
import jax.numpy as jnp
from jax.experimental import pallas as pl
from jax.experimental.pallas import tpu as pltpu

LANE = 128
_MiB = 1 << 20


def _round_up(x, m):
    return ((x + m - 1) // m) * m


def _pad_axis(a, axis, new_size):
    pad = new_size - a.shape[axis]
    if pad == 0:
        return a
    widths = [(0, 0)] * a.ndim
    widths[axis] = (0, pad)
    return jnp.pad(a, widths)


# ----------------------------------------------------------------------------
# Kernel
# ----------------------------------------------------------------------------
def _encoder_layer_kernel(xk_ref, xq_ref, bias_ref,
                          wq_ref, bq_ref, wkv_ref, bkv_ref,
                          w1_ref, b1_ref, w2_ref, b2_ref,
                          gamma_ref, beta_ref,
                          out_ref, *, eps, out_size, hp):
    f32 = jnp.float32
    bf16 = jnp.bfloat16

    nb, lq, fq = xq_ref.shape
    _, lk, fk = xk_ref.shape
    outp = w2_ref.shape[1]          # padded out width (multiple of 128)

    # ---- fold batch into the matmul M dimension; activations are bf16 ------
    xq = xq_ref[...].reshape(nb * lq, fq)
    xk = xk_ref[...].reshape(nb * lk, fk)

    # Q projection (1/sqrt(H) already folded into wq/bq at prep time).
    q = jnp.dot(xq, wq_ref[...], preferred_element_type=f32) + bq_ref[...]
    # Fused K|V projection: one [M, Fk] x [Fk, 2*Hp] MXU pass, then a
    # 128-lane-aligned (free) slice.
    kv = jnp.dot(xk, wkv_ref[...], preferred_element_type=f32) + bkv_ref[...]
    k = kv[:, :hp]
    v = kv[:, hp:]

    qb = q.reshape(nb, lq, hp).astype(bf16)
    kb = k.reshape(nb, lk, hp).astype(bf16)
    vb = v.reshape(nb, lk, hp).astype(bf16)

    # ---- batched attention (no explicit k.T materialization) ---------------
    # TODO(synk): if the lowered dump shows per-batch vxpose on kb, restructure
    # so k is produced in [H, Lk] layout (head dim on sublanes).
    scores = jnp.einsum('bqh,bkh->bqk', qb, kb, preferred_element_type=f32)
    scores = scores + bias_ref[...]            # additive mask bias (0 / -1e9)

    m = jnp.max(scores, axis=-1, keepdims=True)
    p = jnp.exp(scores - m)
    denom = jnp.sum(p, axis=-1, keepdims=True)
    attn = p * pl.reciprocal(denom, approx=True)

    att = jnp.einsum('bqk,bkh->bqh', attn.astype(bf16), vb,
                     preferred_element_type=f32)
    att2 = att.reshape(nb * lq, hp)            # [M, 128*]  f32

    # ---- LinearResidualBlock: FF + residual + LayerNorm ---------------------
    h = jnp.dot(att2.astype(bf16), w1_ref[...], preferred_element_type=f32) + b1_ref[...]
    h = jnp.maximum(h, 0.0)
    f = jnp.dot(h.astype(bf16), w2_ref[...], preferred_element_type=f32) + b2_ref[...]

    y = f + att2                               # padded lanes of y are exactly 0

    # LayerNorm statistics over the REAL out_size lanes only.  Padded lanes of
    # y are exactly zero (padded weight cols / biases are zero), so plain sums
    # over the padded width equal sums over the real width.
    inv_n = 1.0 / out_size
    lane = jax.lax.broadcasted_iota(jnp.int32, (1, outp), 1)
    lane_mask = (lane < out_size).astype(f32)

    mu = jnp.sum(y, axis=-1, keepdims=True) * inv_n
    d = (y - mu) * lane_mask
    var = jnp.sum(d * d, axis=-1, keepdims=True) * inv_n
    y_hat = d * jax.lax.rsqrt(var + eps)
    out = y_hat * gamma_ref[...] + beta_ref[...]

    # Lane-dense (128-wide) unmasked store.
    out_ref[...] = out.reshape(nb, lq, outp).astype(out_ref.dtype)


# ----------------------------------------------------------------------------
# One-time parameter preparation (hoisted off the per-call hot path)
# ----------------------------------------------------------------------------
def prepare_params(params):
    """Pads / fuses / casts the weights once:
       * all feature widths padded to 128 lanes (bf16 weights, f32 biases),
       * K and V projections fused into a single [Fk, 2*Hp] weight,
       * 1/sqrt(H) folded into the Q projection weight and bias."""
    bf16, f32 = jnp.bfloat16, jnp.float32
    H = params["wq"].shape[1]
    Hid = params["w1"].shape[1]
    out_size = params["w2"].shape[1]
    assert H == out_size, "LinearResidualBlock residual needs in_size == out_size"

    Hp = _round_up(H, LANE)
    HidP = _round_up(Hid, LANE)
    OutP = Hp                                   # == round_up(out_size, 128)

    scale = 1.0 / math.sqrt(H)
    wq = _pad_axis(params["wq"] * scale, 1, Hp).astype(bf16)
    bq = _pad_axis(params["bq"] * scale, 1, Hp).astype(f32)
    wk = _pad_axis(params["wk"], 1, Hp)
    wv = _pad_axis(params["wv"], 1, Hp)
    bk = _pad_axis(params["bk"], 1, Hp)
    bv = _pad_axis(params["bv"], 1, Hp)
    wkv = jnp.concatenate([wk, wv], axis=1).astype(bf16)     # [Fk, 2*Hp]
    bkv = jnp.concatenate([bk, bv], axis=1).astype(f32)      # [1, 2*Hp]
    w1 = _pad_axis(_pad_axis(params["w1"], 0, Hp), 1, HidP).astype(bf16)
    b1 = _pad_axis(params["b1"], 1, HidP).astype(f32)
    w2 = _pad_axis(_pad_axis(params["w2"], 0, HidP), 1, OutP).astype(bf16)
    b2 = _pad_axis(params["b2"], 1, OutP).astype(f32)
    gamma = _pad_axis(params["gamma"], 1, OutP).astype(f32)
    beta = _pad_axis(params["beta"], 1, OutP).astype(f32)

    return dict(wq=wq, bq=bq, wkv=wkv, bkv=bkv, w1=w1, b1=b1, w2=w2, b2=b2,
                gamma=gamma, beta=beta, H=H, Hp=Hp, HidP=HidP, OutP=OutP,
                out_size=out_size)


# ----------------------------------------------------------------------------
# Wrapper
# ----------------------------------------------------------------------------
def _vmem_bytes(block_b, lqp, lkp, fq, fk, hp, hidp, outp, out_bytes):
    """Rough per-step VMEM footprint: double-buffered streamed blocks +
    resident weights + f32 intermediates (q, kv, scores/attn, att, h, f/y)."""
    bf, f = 2, 4
    streamed = block_b * (lkp * fk * bf + lqp * fq * bf + lkp * f
                          + lqp * outp * out_bytes)
    weights = (fq * hp + fk * 2 * hp + hp * hidp + hidp * outp) * bf \
              + (3 * hp + hidp + 3 * outp) * f
    inter = block_b * (lqp * hp + lkp * 2 * hp + 2 * lqp * lkp
                       + lqp * hp + lqp * hidp + 2 * lqp * outp) * f
    return 2 * streamed + weights + inter


def cross_attention_encoder_layer(x_k, x_q, x_k_mask, prepared, *,
                                  block_b=None, out_dtype=jnp.float32,
                                  eps=1e-5):
    """x_k: [B, Lk, Fk], x_q: [B, Lq, Fq], x_k_mask: [B, Lk] float (1 valid / 0 pad).
    `prepared` is the output of prepare_params()."""
    B, Lk, Fk = x_k.shape
    _, Lq, Fq = x_q.shape
    Hp, HidP, OutP = prepared["Hp"], prepared["HidP"], prepared["OutP"]
    out_size = prepared["out_size"]

    bf16, f32 = jnp.bfloat16, jnp.float32

    # Lane-dense scores: pad Lk to a multiple of 128 (padded keys get a -1e9
    # bias so they vanish in the softmax).  Pad Lq to a multiple of 16 so bf16
    # q tiles are sublane-packed.
    Lk_pad = _round_up(Lk, LANE)
    Lq_pad = _round_up(Lq, 16)

    # ---- batch blocking ----------------------------------------------------
    out_bytes = jnp.dtype(out_dtype).itemsize
    if block_b is None:
        target_rows = 512                      # MXU M rows per grid step
        block_b = max(1, min(B, target_rows // max(Lq_pad, 1)))
        if B >= 2:                             # >= 2 grid steps: both v7x TCs busy
            block_b = min(block_b, -(-B // 2))
        while block_b > 1 and _vmem_bytes(block_b, Lq_pad, Lk_pad, Fq, Fk,
                                          Hp, HidP, OutP, out_bytes) > 48 * _MiB:
            block_b = max(1, block_b // 2)
    B_pad = _round_up(B, block_b)

    vmem_est = _vmem_bytes(block_b, Lq_pad, Lk_pad, Fq, Fk, Hp, HidP, OutP,
                           out_bytes)
    vmem_limit = int(min(56 * _MiB, max(32 * _MiB, 2 * vmem_est)))

    # ---- activations: bf16 streaming + additive mask bias -------------------
    x_k_p = _pad_axis(_pad_axis(x_k, 1, Lk_pad), 0, B_pad).astype(bf16)
    x_q_p = _pad_axis(_pad_axis(x_q, 1, Lq_pad), 0, B_pad).astype(bf16)
    mask_p = _pad_axis(x_k_mask.astype(f32), 1, Lk_pad)       # padded keys -> 0
    mask_bias = ((mask_p - 1.0) * 1e9)[:, None, :]            # [B, 1, Lk_pad]
    mask_bias = _pad_axis(mask_bias, 0, B_pad)                # padded batches -> 0

    kernel = functools.partial(_encoder_layer_kernel, eps=eps,
                               out_size=out_size, hp=Hp)

    def full(a):
        nd = a.ndim
        return pl.BlockSpec(a.shape, lambda b, _nd=nd: (0,) * _nd)

    p = prepared
    grid_spec = pltpu.PrefetchScalarGridSpec(
        num_scalar_prefetch=0,
        grid=(B_pad // block_b,),
        in_specs=[
            pl.BlockSpec((block_b, Lk_pad, Fk), lambda b: (b, 0, 0)),   # x_k
            pl.BlockSpec((block_b, Lq_pad, Fq), lambda b: (b, 0, 0)),   # x_q
            pl.BlockSpec((block_b, 1, Lk_pad),  lambda b: (b, 0, 0)),   # mask bias
            full(p["wq"]), full(p["bq"]), full(p["wkv"]), full(p["bkv"]),
            full(p["w1"]), full(p["b1"]), full(p["w2"]), full(p["b2"]),
            full(p["gamma"]), full(p["beta"]),
        ],
        out_specs=pl.BlockSpec((block_b, Lq_pad, OutP), lambda b: (b, 0, 0)),
    )

    out_padded = pl.pallas_call(
        kernel,
        out_shape=jax.ShapeDtypeStruct((B_pad, Lq_pad, OutP), out_dtype),
        grid_spec=grid_spec,
        compiler_params=pltpu.CompilerParams(
            dimension_semantics=("parallel",),
            vmem_limit_bytes=vmem_limit),
    )(x_k_p, x_q_p, mask_bias,
      p["wq"], p["bq"], p["wkv"], p["bkv"],
      p["w1"], p["b1"], p["w2"], p["b2"], p["gamma"], p["beta"])

    # TODO(synk): downstream consumers could take the padded [B_pad, Lq_pad, OutP]
    # layout directly and skip this slice copy.
    return out_padded[:B, :Lq, :out_size]


# ----------------------------------------------------------------------------
# Test harness
# ----------------------------------------------------------------------------
def init_params(key, F_kv, F_q, H, ff_hidden, ff_out):
    ks = jax.random.split(key, 10)
    g = lambda k, shp, fan_in: (jax.random.normal(k, shp, jnp.float32)
                                / jnp.sqrt(jnp.float32(fan_in)))
    return {
        "wq": g(ks[0], (F_q, H), F_q),     "bq": jnp.zeros((1, H), jnp.float32),
        "wk": g(ks[1], (F_kv, H), F_kv),   "bk": jnp.zeros((1, H), jnp.float32),
        "wv": g(ks[2], (F_kv, H), F_kv),   "bv": jnp.zeros((1, H), jnp.float32),
        "w1": g(ks[3], (H, ff_hidden), H), "b1": jnp.zeros((1, ff_hidden), jnp.float32),
        "w2": g(ks[4], (ff_hidden, ff_out), ff_hidden),
        "b2": jnp.zeros((1, ff_out), jnp.float32),
        "gamma": jnp.ones((1, ff_out), jnp.float32),
        "beta": jnp.zeros((1, ff_out), jnp.float32),
    }


def reference(x_k, x_q, x_k_mask, p, eps=1e-5):
    """Matches the kernel's math: 1/sqrt(H) folded into the Q projection,
    bf16 MXU operands, f32 accumulation, additive mask bias, f32 softmax/LN."""
    bf16, f32 = jnp.bfloat16, jnp.float32
    H = p["wq"].shape[1]
    scale = 1.0 / math.sqrt(H)
    q = jnp.einsum('blf,fh->blh', x_q.astype(bf16),
                   (p["wq"] * scale).astype(bf16),
                   preferred_element_type=f32) + p["bq"][0] * scale
    k = jnp.einsum('blf,fh->blh', x_k.astype(bf16), p["wk"].astype(bf16),
                   preferred_element_type=f32) + p["bk"][0]
    v = jnp.einsum('blf,fh->blh', x_k.astype(bf16), p["wv"].astype(bf16),
                   preferred_element_type=f32) + p["bv"][0]
    scores = jnp.einsum('bqh,bkh->bqk', q.astype(bf16), k.astype(bf16),
                        preferred_element_type=f32)
    scores = scores + (x_k_mask[:, None, :].astype(f32) - 1.0) * 1e9
    attn = jax.nn.softmax(scores, axis=-1)
    att = jnp.einsum('bqk,bkh->bqh', attn.astype(bf16), v.astype(bf16),
                     preferred_element_type=f32)
    h = jax.nn.relu(jnp.einsum('bqh,hd->bqd', att.astype(bf16),
                               p["w1"].astype(bf16),
                               preferred_element_type=f32) + p["b1"][0])
    f = jnp.einsum('bqd,do->bqo', h.astype(bf16), p["w2"].astype(bf16),
                   preferred_element_type=f32) + p["b2"][0]
    y = f + att
    mu = y.mean(-1, keepdims=True)
    var = ((y - mu) ** 2).mean(-1, keepdims=True)
    return (y - mu) / jnp.sqrt(var + eps) * p["gamma"][0] + p["beta"][0]


if __name__ == "__main__":
    B, Lk, Lq = 2, 16, 8
    F_kv, F_q = 16, 16
    H, ff_hidden, ff_out = 32, 64, 32   # LinearResidualBlock: in=out=32, hidden=64

    key = jax.random.PRNGKey(0)
    k1, k2, k3, kp = jax.random.split(key, 4)
    x_k = jax.random.normal(k1, (B, Lk, F_kv), jnp.float32)
    x_q = jax.random.normal(k2, (B, Lq, F_q), jnp.float32)
    # valid mask: last 4 key positions of batch 1 are padded
    x_k_mask = jnp.ones((B, Lk), jnp.float32).at[1, -4:].set(0.0)

    params = init_params(kp, F_kv, F_q, H, ff_hidden, ff_out)
    prepared = prepare_params(params)            # one-time weight prep

    out = cross_attention_encoder_layer(x_k, x_q, x_k_mask, prepared)
    out = jax.block_until_ready(out)

    ref = reference(x_k, x_q, x_k_mask, params)
    assert out.shape == (B, Lq, ff_out), out.shape
    err = float(jnp.abs(out - ref).max())
    assert err < 2e-2, err
    print("KERNEL_OK")
</pallas_src>

<mosaic_0001>
module attributes {stable_mosaic.version = 11 : i64} {
  func.func @_encoder_layer_kernel(%arg0: i32, %arg1: memref<1x128x16xbf16, #tpu.memory_space<vmem>>, %arg2: memref<1x16x16xbf16, #tpu.memory_space<vmem>>, %arg3: memref<1x1x128xf32, #tpu.memory_space<vmem>>, %arg4: memref<16x128xbf16, #tpu.memory_space<vmem>>, %arg5: memref<1x128xf32, #tpu.memory_space<vmem>>, %arg6: memref<16x256xbf16, #tpu.memory_space<vmem>>, %arg7: memref<1x256xf32, #tpu.memory_space<vmem>>, %arg8: memref<128x128xbf16, #tpu.memory_space<vmem>>, %arg9: memref<1x128xf32, #tpu.memory_space<vmem>>, %arg10: memref<128x128xbf16, #tpu.memory_space<vmem>>, %arg11: memref<1x128xf32, #tpu.memory_space<vmem>>, %arg12: memref<1x128xf32, #tpu.memory_space<vmem>>, %arg13: memref<1x128xf32, #tpu.memory_space<vmem>>, %arg14: memref<1x16x128xf32, #tpu.memory_space<vmem>>) attributes {dimension_semantics = [#tpu.dimension_semantics<parallel>], iteration_bounds = array<i64: 2>, scalar_prefetch = 0 : i64, scratch_operands = 0 : i64, tpu.core_type = #tpu.core_type<tc>, window_params = [{transform_indices = @transform_0, window_bounds = array<i64: 1, 128, 16>}, {transform_indices = @transform_1, window_bounds = array<i64: 1, 16, 16>}, {transform_indices = @transform_2, window_bounds = array<i64: 1, 1, 128>}, {pipeline_mode = #tpu.pipeline_mode<synchronous>, transform_indices = @transform_3, window_bounds = array<i64: 16, 128>}, {pipeline_mode = #tpu.pipeline_mode<synchronous>, transform_indices = @transform_4, window_bounds = array<i64: 1, 128>}, {pipeline_mode = #tpu.pipeline_mode<synchronous>, transform_indices = @transform_5, window_bounds = array<i64: 16, 256>}, {pipeline_mode = #tpu.pipeline_mode<synchronous>, transform_indices = @transform_6, window_bounds = array<i64: 1, 256>}, {pipeline_mode = #tpu.pipeline_mode<synchronous>, transform_indices = @transform_7, window_bounds = array<i64: 128, 128>}, {pipeline_mode = #tpu.pipeline_mode<synchronous>, transform_indices = @transform_8, window_bounds = array<i64: 1, 128>}, {pipeline_mode = #tpu.pipeline_mode<synchronous>, transform_indices = @transform_9, window_bounds = array<i64: 128, 128>}, {pipeline_mode = #tpu.pipeline_mode<synchronous>, transform_indices = @transform_10, window_bounds = array<i64: 1, 128>}, {pipeline_mode = #tpu.pipeline_mode<synchronous>, transform_indices = @transform_11, window_bounds = array<i64: 1, 128>}, {pipeline_mode = #tpu.pipeline_mode<synchronous>, transform_indices = @transform_12, window_bounds = array<i64: 1, 128>}, {transform_indices = @transform_13, window_bounds = array<i64: 1, 16, 128>}]} {
    %c0 = arith.constant 0 : index
    %c0_0 = arith.constant 0 : index
    %c0_1 = arith.constant 0 : index
    %0 = vector.load %arg2[%c0, %c0_0, %c0_1] : memref<1x16x16xbf16, #tpu.memory_space<vmem>>, vector<1x16x16xbf16>
    %1 = vector.shape_cast %0 : vector<1x16x16xbf16> to vector<16x16xbf16>
    %c0_2 = arith.constant 0 : index
    %c0_3 = arith.constant 0 : index
    %c0_4 = arith.constant 0 : index
    %2 = vector.load %arg1[%c0_2, %c0_3, %c0_4] : memref<1x128x16xbf16, #tpu.memory_space<vmem>>, vector<1x128x16xbf16>
    %3 = vector.shape_cast %2 : vector<1x128x16xbf16> to vector<128x16xbf16>
    %c0_5 = arith.constant 0 : index
    %c0_6 = arith.constant 0 : index
    %4 = vector.load %arg4[%c0_5, %c0_6] : memref<16x128xbf16, #tpu.memory_space<vmem>>, vector<16x128xbf16>
    %cst = arith.constant dense<0.000000e+00> : vector<16x128xf32>
    %5 = tpu.matmul %1, %4, %cst {dimension_numbers = #tpu.dot_dimension_numbers<[1], [0], [0], [1], [0, 0, 1, 1], [], []>} : vector<16x16xbf16>, vector<16x128xbf16>, vector<16x128xf32> -> vector<16x128xf32>
    %c0_7 = arith.constant 0 : index
    %c0_8 = arith.constant 0 : index
    %6 = vector.load %arg5[%c0_7, %c0_8] : memref<1x128xf32, #tpu.memory_space<vmem>>, vector<1x128xf32>
    %7 = vector.broadcast %6 : vector<1x128xf32> to vector<16x128xf32>
    %8 = arith.addf %5, %7 : vector<16x128xf32>
    %c0_9 = arith.constant 0 : index
    %c0_10 = arith.constant 0 : index
    %9 = vector.load %arg6[%c0_9, %c0_10] : memref<16x256xbf16, #tpu.memory_space<vmem>>, vector<16x256xbf16>
    %cst_11 = arith.constant dense<0.000000e+00> : vector<128x256xf32>
    %10 = tpu.matmul %3, %9, %cst_11 {dimension_numbers = #tpu.dot_dimension_numbers<[1], [0], [0], [1], [0, 0, 1, 1], [], []>} : vector<128x16xbf16>, vector<16x256xbf16>, vector<128x256xf32> -> vector<128x256xf32>
    %c0_12 = arith.constant 0 : index
    %c0_13 = arith.constant 0 : index
    %11 = vector.load %arg7[%c0_12, %c0_13] : memref<1x256xf32, #tpu.memory_space<vmem>>, vector<1x256xf32>
    %12 = vector.broadcast %11 : vector<1x256xf32> to vector<128x256xf32>
    %13 = arith.addf %10, %12 : vector<128x256xf32>
    %14 = vector.extract_strided_slice %13 {offsets = [0, 0], sizes = [128, 128], strides = [1, 1]} : vector<128x256xf32> to vector<128x128xf32>
    %15 = vector.extract_strided_slice %13 {offsets = [0, 128], sizes = [128, 128], strides = [1, 1]} : vector<128x256xf32> to vector<128x128xf32>
    %16 = vector.shape_cast %8 : vector<16x128xf32> to vector<1x16x128xf32>
    %17 = arith.truncf %16 : vector<1x16x128xf32> to vector<1x16x128xbf16>
    %18 = vector.shape_cast %14 : vector<128x128xf32> to vector<1x128x128xf32>
    %19 = arith.truncf %18 : vector<1x128x128xf32> to vector<1x128x128xbf16>
    %20 = vector.shape_cast %15 : vector<128x128xf32> to vector<1x128x128xf32>
    %21 = arith.truncf %20 : vector<1x128x128xf32> to vector<1x128x128xbf16>
    "tpu.trace_start"() <{level = 10 : i32, message = "bqh,bkh->bqk"}> : () -> ()
    %cst_14 = arith.constant dense<0.000000e+00> : vector<1x16x128xf32>
    %22 = tpu.matmul %17, %19, %cst_14 {dimension_numbers = #tpu.dot_dimension_numbers<[2], [2], [1], [1], [0, 0, 0, 1, 1, 1], [0], [0]>} : vector<1x16x128xbf16>, vector<1x128x128xbf16>, vector<1x16x128xf32> -> vector<1x16x128xf32>
    "tpu.trace_stop"() : () -> ()
    %c0_15 = arith.constant 0 : index
    %c0_16 = arith.constant 0 : index
    %c0_17 = arith.constant 0 : index
    %23 = vector.load %arg3[%c0_15, %c0_16, %c0_17] : memref<1x1x128xf32, #tpu.memory_space<vmem>>, vector<1x1x128xf32>
    %24 = vector.broadcast %23 : vector<1x1x128xf32> to vector<1x16x128xf32>
    %25 = arith.addf %22, %24 : vector<1x16x128xf32>
    %cst_18 = arith.constant dense<0xFF800000> : vector<1x16xf32>
    %26 = vector.multi_reduction <maximumf>, %25, %cst_18 [2] : vector<1x16x128xf32> to vector<1x16xf32>
    %27 = vector.shape_cast %26 : vector<1x16xf32> to vector<1x16x1xf32>
    %28 = vector.broadcast %27 : vector<1x16x1xf32> to vector<1x16x128xf32>
    %29 = arith.subf %25, %28 : vector<1x16x128xf32>
    %30 = math.exp %29 : vector<1x16x128xf32>
    %cst_19 = arith.constant dense<0.000000e+00> : vector<1x16xf32>
    %31 = vector.multi_reduction <add>, %30, %cst_19 [2] : vector<1x16x128xf32> to vector<1x16xf32>
    %32 = vector.shape_cast %31 : vector<1x16xf32> to vector<1x16x1xf32>
    %33 = tpu.reciprocal %32 {approx = true} : vector<1x16x1xf32> -> vector<1x16x1xf32>
    %34 = vector.broadcast %33 : vector<1x16x1xf32> to vector<1x16x128xf32>
    %35 = arith.mulf %30, %34 : vector<1x16x128xf32>
    %36 = arith.truncf %35 : vector<1x16x128xf32> to vector<1x16x128xbf16>
    "tpu.trace_start"() <{level = 10 : i32, message = "bqk,bkh->bqh"}> : () -> ()
    %cst_20 = arith.constant dense<0.000000e+00> : vector<1x16x128xf32>
    %37 = tpu.matmul %36, %21, %cst_20 {dimension_numbers = #tpu.dot_dimension_numbers<[2], [1], [1], [2], [0, 0, 0, 1, 1, 2], [0], [0]>} : vector<1x16x128xbf16>, vector<1x128x128xbf16>, vector<1x16x128xf32> -> vector<1x16x128xf32>
    "tpu.trace_stop"() : () -> ()
    %38 = vector.shape_cast %37 : vector<1x16x128xf32> to vector<16x128xf32>
    %39 = arith.truncf %38 : vector<16x128xf32> to vector<16x128xbf16>
    %c0_21 = arith.constant 0 : index
    %c0_22 = arith.constant 0 : index
    %40 = vector.load %arg8[%c0_21, %c0_22] : memref<128x128xbf16, #tpu.memory_space<vmem>>, vector<128x128xbf16>
    %cst_23 = arith.constant dense<0.000000e+00> : vector<16x128xf32>
    %41 = tpu.matmul %39, %40, %cst_23 {dimension_numbers = #tpu.dot_dimension_numbers<[1], [0], [0], [1], [0, 0, 1, 1], [], []>} : vector<16x128xbf16>, vector<128x128xbf16>, vector<16x128xf32> -> vector<16x128xf32>
    %c0_24 = arith.constant 0 : index
    %c0_25 = arith.constant 0 : index
    %42 = vector.load %arg9[%c0_24, %c0_25] : memref<1x128xf32, #tpu.memory_space<vmem>>, vector<1x128xf32>
    %43 = vector.broadcast %42 : vector<1x128xf32> to vector<16x128xf32>
    %44 = arith.addf %41, %43 : vector<16x128xf32>
    %cst_26 = arith.constant 0.000000e+00 : f32
    %45 = vector.broadcast %cst_26 : f32 to vector<16x128xf32>
    %46 = arith.maximumf %44, %45 : vector<16x128xf32>
    %47 = arith.truncf %46 : vector<16x128xf32> to vector<16x128xbf16>
    %c0_27 = arith.constant 0 : index
    %c0_28 = arith.constant 0 : index
    %48 = vector.load %arg10[%c0_27, %c0_28] : memref<128x128xbf16, #tpu.memory_space<vmem>>, vector<128x128xbf16>
    %cst_29 = arith.constant dense<0.000000e+00> : vector<16x128xf32>
    %49 = tpu.matmul %47, %48, %cst_29 {dimension_numbers = #tpu.dot_dimension_numbers<[1], [0], [0], [1], [0, 0, 1, 1], [], []>} : vector<16x128xbf16>, vector<128x128xbf16>, vector<16x128xf32> -> vector<16x128xf32>
    %c0_30 = arith.constant 0 : index
    %c0_31 = arith.constant 0 : index
    %50 = vector.load %arg11[%c0_30, %c0_31] : memref<1x128xf32, #tpu.memory_space<vmem>>, vector<1x128xf32>
    %51 = vector.broadcast %50 : vector<1x128xf32> to vector<16x128xf32>
    %52 = arith.addf %49, %51 : vector<16x128xf32>
    %53 = arith.addf %52, %38 : vector<16x128xf32>
    %54 = tpu.iota {dimensions = array<i32: 1>} : vector<1x128xi32>
    %c32_i32 = arith.constant 32 : i32
    %55 = vector.broadcast %c32_i32 : i32 to vector<1x128xi32>
    %56 = arith.cmpi slt, %54, %55 : vector<1x128xi32>
    %57 = arith.extui %56 : vector<1x128xi1> to vector<1x128xi32>
    %58 = arith.sitofp %57 : vector<1x128xi32> to vector<1x128xf32>
    %cst_32 = arith.constant dense<0.000000e+00> : vector<16xf32>
    %59 = vector.multi_reduction <add>, %53, %cst_32 [1] : vector<16x128xf32> to vector<16xf32>
    %60 = vector.shape_cast %59 : vector<16xf32> to vector<16x1xf32>
    %cst_33 = arith.constant 3.125000e-02 : f32
    %61 = vector.broadcast %cst_33 : f32 to vector<16x1xf32>
    %62 = arith.mulf %60, %61 : vector<16x1xf32>
    %63 = vector.broadcast %62 : vector<16x1xf32> to vector<16x128xf32>
    %64 = arith.subf %53, %63 : vector<16x128xf32>
    %65 = vector.broadcast %58 : vector<1x128xf32> to vector<16x128xf32>
    %66 = arith.mulf %64, %65 : vector<16x128xf32>
    %67 = arith.mulf %66, %66 : vector<16x128xf32>
    %cst_34 = arith.constant dense<0.000000e+00> : vector<16xf32>
    %68 = vector.multi_reduction <add>, %67, %cst_34 [1] : vector<16x128xf32> to vector<16xf32>
    %69 = vector.shape_cast %68 : vector<16xf32> to vector<16x1xf32>
    %cst_35 = arith.constant 3.125000e-02 : f32
    %70 = vector.broadcast %cst_35 : f32 to vector<16x1xf32>
    %71 = arith.mulf %69, %70 : vector<16x1xf32>
    %cst_36 = arith.constant 9.99999974E-6 : f32
    %72 = vector.broadcast %cst_36 : f32 to vector<16x1xf32>
    %73 = arith.addf %71, %72 : vector<16x1xf32>
    %74 = math.rsqrt %73 : vector<16x1xf32>
    %75 = vector.broadcast %74 : vector<16x1xf32> to vector<16x128xf32>
    %76 = arith.mulf %66, %75 : vector<16x128xf32>
    %c0_37 = arith.constant 0 : index
    %c0_38 = arith.constant 0 : index
    %77 = vector.load %arg12[%c0_37, %c0_38] : memref<1x128xf32, #tpu.memory_space<vmem>>, vector<1x128xf32>
    %78 = vector.broadcast %77 : vector<1x128xf32> to vector<16x128xf32>
    %79 = arith.mulf %76, %78 : vector<16x128xf32>
    %c0_39 = arith.constant 0 : index
    %c0_40 = arith.constant 0 : index
    %80 = vector.load %arg13[%c0_39, %c0_40] : memref<1x128xf32, #tpu.memory_space<vmem>>, vector<1x128xf32>
    %81 = vector.broadcast %80 : vector<1x128xf32> to vector<16x128xf32>
    %82 = arith.addf %79, %81 : vector<16x128xf32>
    %83 = vector.shape_cast %82 : vector<16x128xf32> to vector<1x16x128xf32>
    %c0_41 = arith.constant 0 : index
    %c0_42 = arith.constant 0 : index
    %c0_43 = arith.constant 0 : index
    %84 = vector.load %arg14[%c0_41, %c0_42, %c0_43] : memref<1x16x128xf32, #tpu.memory_space<vmem>>, vector<1x16x128xf32>
    tpu.vector_store %arg14[%c0_41, %c0_42, %c0_43], %83 {strides = array<i32>} : memref<1x16x128xf32, #tpu.memory_space<vmem>>, vector<1x16x128xf32>,
    return
  }
  func.func @transform_0(%arg0: i32) -> (i32, i32, i32) {
    %c0_i32 = arith.constant 0 : i32
    %c0_i32_0 = arith.constant 0 : i32
    %c0_i32_1 = arith.constant 0 : i32
    return %arg0, %c0_i32, %c0_i32_0 : i32, i32, i32
  }
  func.func @transform_1(%arg0: i32) -> (i32, i32, i32) {
    %c0_i32 = arith.constant 0 : i32
    %c0_i32_0 = arith.constant 0 : i32
    %c0_i32_1 = arith.constant 0 : i32
    return %arg0, %c0_i32, %c0_i32_0 : i32, i32, i32
  }
  func.func @transform_2(%arg0: i32) -> (i32, i32, i32) {
    %c0_i32 = arith.constant 0 : i32
    %c0_i32_0 = arith.constant 0 : i32
    %c0_i32_1 = arith.constant 0 : i32
    return %arg0, %c0_i32, %c0_i32_0 : i32, i32, i32
  }
  func.func @transform_3(%arg0: i32) -> (i32, i32) {
    %c0_i32 = arith.constant 0 : i32
    %c0_i32_0 = arith.constant 0 : i32
    %c0_i32_1 = arith.constant 0 : i32
    return %c0_i32, %c0_i32_0 : i32, i32
  }
  func.func @transform_4(%arg0: i32) -> (i32, i32) {
    %c0_i32 = arith.constant 0 : i32
    %c0_i32_0 = arith.constant 0 : i32
    %c0_i32_1 = arith.constant 0 : i32
    return %c0_i32, %c0_i32_0 : i32, i32
  }
  func.func @transform_5(%arg0: i32) -> (i32, i32) {
    %c0_i32 = arith.constant 0 : i32
    %c0_i32_0 = arith.constant 0 : i32
    %c0_i32_1 = arith.constant 0 : i32
    return %c0_i32, %c0_i32_0 : i32, i32
  }
  func.func @transform_6(%arg0: i32) -> (i32, i32) {
    %c0_i32 = arith.constant 0 : i32
    %c0_i32_0 = arith.constant 0 : i32
    %c0_i32_1 = arith.constant 0 : i32
    return %c0_i32, %c0_i32_0 : i32, i32
  }
  func.func @transform_7(%arg0: i32) -> (i32, i32) {
    %c0_i32 = arith.constant 0 : i32
    %c0_i32_0 = arith.constant 0 : i32
    %c0_i32_1 = arith.constant 0 : i32
    return %c0_i32, %c0_i32_0 : i32, i32
  }
  func.func @transform_8(%arg0: i32) -> (i32, i32) {
    %c0_i32 = arith.constant 0 : i32
    %c0_i32_0 = arith.constant 0 : i32
    %c0_i32_1 = arith.constant 0 : i32
    return %c0_i32, %c0_i32_0 : i32, i32
  }
  func.func @transform_9(%arg0: i32) -> (i32, i32) {
    %c0_i32 = arith.constant 0 : i32
    %c0_i32_0 = arith.constant 0 : i32
    %c0_i32_1 = arith.constant 0 : i32
    return %c0_i32, %c0_i32_0 : i32, i32
  }
  func.func @transform_10(%arg0: i32) -> (i32, i32) {
    %c0_i32 = arith.constant 0 : i32
    %c0_i32_0 = arith.constant 0 : i32
    %c0_i32_1 = arith.constant 0 : i32
    return %c0_i32, %c0_i32_0 : i32, i32
  }
  func.func @transform_11(%arg0: i32) -> (i32, i32) {
    %c0_i32 = arith.constant 0 : i32
    %c0_i32_0 = arith.constant 0 : i32
    %c0_i32_1 = arith.constant 0 : i32
    return %c0_i32, %c0_i32_0 : i32, i32
  }
  func.func @transform_12(%arg0: i32) -> (i32, i32) {
    %c0_i32 = arith.constant 0 : i32
    %c0_i32_0 = arith.constant 0 : i32
    %c0_i32_1 = arith.constant 0 : i32
    return %c0_i32, %c0_i32_0 : i32, i32
  }
  func.func @transform_13(%arg0: i32) -> (i32, i32, i32) {
    %c0_i32 = arith.constant 0 : i32
    %c0_i32_0 = arith.constant 0 : i32
    %c0_i32_1 = arith.constant 0 : i32
    return %arg0, %c0_i32, %c0_i32_0 : i32, i32, i32
  }
}

</mosaic_0001>

<llo_original>
// kernel: tpu_custom_call.1
$region0: #{tpu_custom_call.1}
  #allocation0 [shape = 'u32[]', space=smem, size = 0x4, offset = 0x4, fixed_abs, tag = 'smem constant byte address 0x4 - core index']
  #allocation1 [shape = 'u32[144,128]{1,0:T(1,128)}', space=vmem, size = 0x12000, scoped, tag = 'internal scratch']
  %s0 = inlined_call_operand.vmem [shape: bf16[2,128,16], index: 0, kind: input, shape index: {}]
  %s1 = inlined_call_operand.vmem [shape: bf16[2,16,16], index: 1, kind: input, shape index: {}]
  %s2 = inlined_call_operand.vmem [shape: f32[2,1,128], index: 2, kind: input, shape index: {}]
  %s3 = inlined_call_operand.hbm [shape: bf16[16,128], index: 3, kind: input, shape index: {}]
  %s4 = inlined_call_operand.hbm [shape: f32[1,128], index: 4, kind: input, shape index: {}]
  %s5 = inlined_call_operand.vmem [shape: bf16[16,256], index: 5, kind: input, shape index: {}]
  %s6 = inlined_call_operand.vmem [shape: f32[1,256], index: 6, kind: input, shape index: {}]
  %s7 = inlined_call_operand.vmem [shape: bf16[128,128], index: 7, kind: input, shape index: {}]
  %s8 = inlined_call_operand.vmem [shape: f32[1,128], index: 8, kind: input, shape index: {}]
  %s9 = inlined_call_operand.vmem [shape: bf16[128,128], index: 9, kind: input, shape index: {}]
  %s10 = inlined_call_operand.vmem [shape: f32[1,128], index: 10, kind: input, shape index: {}]
  %s11 = inlined_call_operand.vmem [shape: f32[1,128], index: 11, kind: input, shape index: {}]
  %s12 = inlined_call_operand.vmem [shape: f32[1,128], index: 12, kind: input, shape index: {}]
  %s13 = inlined_call_operand.hbm [shape: f32[2,16,128], index: 13, kind: output, shape index: {}]
  %s14 = sld [smem:[#allocation0]]
  $region93: #{tpu_custom_call.1} parent=0
    _
  %s16 = ssub.s32 1, %s14
  %s17 = scalar_select 0, %s16, %s14
  $region1: #{tpu_custom_call.1} parent=0
    #allocation2 [shape = 'u8[4096]{0}', space=vmem, size = 0x1000, scoped, tag = 'input window, operand 3, single buffered']
    #allocation3 [shape = 's32[2]{0}', space=sflag, size = 0x8, scoped, tag = 'scoped memory for tpu_custom_call.1']
    #allocation4 [shape = 's32[2]{0}', space=sflag, size = 0x8, scoped, tag = 'scoped memory for tpu_custom_call.1']
    #allocation5 [shape = 'u8[512]{0}', space=vmem, size = 0x400, scoped, tag = 'input window, operand 4, single buffered']
    #allocation6 [shape = 's32[1]{0}', space=sflag, size = 0x4, scoped, tag = 'scoped memory for tpu_custom_call.1']
    #allocation7 [shape = 'u8[16384]{0}', space=vmem, size = 0x4000, scoped, tag = 'output window, operand 0']
    %18 = vsyncpa [#allocation3], 0
    %19 = vsyncpa [#allocation6], 0
    %20 = vsyncpa [#allocation4], 0
    %s21 = scalar_lea.sflag [#allocation4], 1
    %22 = vsyncpa %s21, 0
    loop: start=0, step=1, limit=4
    $region2: #{tpu_custom_call.1} parent=1 // loop_pre_header
      _
    $region3: #{tpu_custom_call.1} parent=1 // loop_header
      %s24 = sphi 0, %s28
      %p25 = scmp.ge.s32.totalorder %s24, 4
      %s34 = sphi 0, %s36
      %s37 = sphi 0, %s34
      %s38 = sphi 0, %s37
      %s54 = sphi 0, %s38
      %s60 = sphi 0, %s62
      %s63 = sphi 0, %s60
      %s64 = sphi 0, %s63
      %s80 = sphi 0, %s64
      %s86 = sphi 0, %s88
      %s89 = sphi 0, %s86
      %s90 = sphi 0, %s89
      %s106 = sphi 0, %s90
      %s110 = sphi 0, %s110
      %s112 = sphi 0, %s110
      %s113 = sphi 0, %s112
      %s127 = sphi 0, %s113
      %s131 = sphi 0, %s131
      %s133 = sphi 0, %s131
      %s134 = sphi 0, %s133
      %s148 = sphi 0, %s134
      %s152 = sphi 0, %s152
      %s154 = sphi 0, %s152
      %s155 = sphi 0, %s154
      %s169 = sphi 0, %s155
      %s173 = sphi 0, %s173
      %s175 = sphi 0, %s173
      %s176 = sphi 0, %s175
      %s190 = sphi 0, %s176
      %s194 = sphi 0, %s194
      %s196 = sphi 0, %s194
      %s197 = sphi 0, %s196
      %s211 = sphi 0, %s197
      %s215 = sphi 0, %s215
      %s217 = sphi 0, %s215
      %s218 = sphi 0, %s217
      %s232 = sphi 0, %s218
      %s236 = sphi 0, %s236
      %s238 = sphi 0, %s236
      %s239 = sphi 0, %s238
      %s253 = sphi 0, %s239
      %s257 = sphi 0, %s257
      %s259 = sphi 0, %s257
      %s260 = sphi 0, %s259
      %s274 = sphi 0, %s260
      %s278 = sphi 0, %s278
      %s280 = sphi 0, %s278
      %s281 = sphi 0, %s280
      %s295 = sphi 0, %s281
      %s299 = sphi 0, %s299
      %s301 = sphi 0, %s299
      %s302 = sphi 0, %s301
      %s316 = sphi 0, %s302
      %s322 = sphi 0, %s324
      %s325 = sphi 0, %s322
      %s326 = sphi 0, %s325
      %s342 = sphi 0, %s326
    $region4: #{tpu_custom_call.1} parent=1 // loop_header_branch
      %27 = sbr.rel (%p25) target = $region8
    $region5: #{tpu_custom_call.1} parent=1 // loop_body
      %s29 = ssub.s32 %s24, 1
      %s30 = ssub.s32 %s24, 2
      %s31 = sadd.s32 %s24, 1
      %s32 = ssub.s32 %s24, %s31
      %p33 = scmp.eq.s32.totalorder %s32, 0
      %s35 = sadd.s32 %s34, 1
      %s36 = scalar_select %p33, %s34, %s35
      %p39 = pneg %p33
      %p40 = scmp.eq.s32.totalorder %s24, 1
      %p41 = por %p39, %p40
      %p42 = scmp.ne.s32.totalorder %s34, %s37
      %p43 = scmp.eq.s32.totalorder %s24, 0
      %p44 = por %p42, %p43
      %p45 = scmp.ne.s32.totalorder %s34, %s37
      %p46 = scmp.eq.s32.totalorder %s29, 1
      %p47 = por %p45, %p46
      %p48 = scmp.ne.s32.totalorder %s37, %s38
      %p49 = scmp.eq.s32.totalorder %s29, 0
      %p50 = por %p48, %p49
      %p51 = scmp.ne.s32.totalorder %s37, %s38
      %p52 = scmp.eq.s32.totalorder %s30, 1
      %p53 = por %p51, %p52
      %p55 = scmp.ne.s32.totalorder %s38, %s54
      %p56 = scmp.eq.s32.totalorder %s30, 0
      %p57 = por %p55, %p56
      %s58 = ssub.s32 %s24, %s31
      %p59 = scmp.eq.s32.totalorder %s58, 0
      %s61 = sadd.s32 %s60, 1
      %s62 = scalar_select %p59, %s60, %s61
      %p65 = pneg %p59
      %p66 = scmp.eq.s32.totalorder %s24, 1
      %p67 = por %p65, %p66
      %p68 = scmp.ne.s32.totalorder %s60, %s63
      %p69 = scmp.eq.s32.totalorder %s24, 0
      %p70 = por %p68, %p69
      %p71 = scmp.ne.s32.totalorder %s60, %s63
      %p72 = scmp.eq.s32.totalorder %s29, 1
      %p73 = por %p71, %p72
      %p74 = scmp.ne.s32.totalorder %s63, %s64
      %p75 = scmp.eq.s32.totalorder %s29, 0
      %p76 = por %p74, %p75
      %p77 = scmp.ne.s32.totalorder %s63, %s64
      %p78 = scmp.eq.s32.totalorder %s30, 1
      %p79 = por %p77, %p78
      %p81 = scmp.ne.s32.totalorder %s64, %s80
      %p82 = scmp.eq.s32.totalorder %s30, 0
      %p83 = por %p81, %p82
      %s84 = ssub.s32 %s24, %s31
      %p85 = scmp.eq.s32.totalorder %s84, 0
      %s87 = sadd.s32 %s86, 1
      %s88 = scalar_select %p85, %s86, %s87
      %p91 = pneg %p85
      %p92 = scmp.eq.s32.totalorder %s24, 1
      %p93 = por %p91, %p92
      %p94 = scmp.ne.s32.totalorder %s86, %s89
      %p95 = scmp.eq.s32.totalorder %s24, 0
      %p96 = por %p94, %p95
      %p97 = scmp.ne.s32.totalorder %s86, %s89
      %p98 = scmp.eq.s32.totalorder %s29, 1
      %p99 = por %p97, %p98
      %p100 = scmp.ne.s32.totalorder %s89, %s90
      %p101 = scmp.eq.s32.totalorder %s29, 0
      %p102 = por %p100, %p101
      %p103 = scmp.ne.s32.totalorder %s89, %s90
      %p104 = scmp.eq.s32.totalorder %s30, 1
      %p105 = por %p103, %p104
      %p107 = scmp.ne.s32.totalorder %s90, %s106
      %p108 = scmp.eq.s32.totalorder %s30, 0
      %p109 = por %p107, %p108
      %s111 = sadd.s32 %s110, 1
      %p114 = scmp.eq.s32.totalorder %s24, 1
      %p115 = scmp.ne.s32.totalorder %s110, %s112
      %p116 = scmp.eq.s32.totalorder %s24, 0
      %p117 = por %p115, %p116
      %p118 = scmp.ne.s32.totalorder %s110, %s112
      %p119 = scmp.eq.s32.totalorder %s29, 1
      %p120 = por %p118, %p119
      %p121 = scmp.ne.s32.totalorder %s112, %s113
      %p122 = scmp.eq.s32.totalorder %s29, 0
      %p123 = por %p121, %p122
      %p124 = scmp.ne.s32.totalorder %s112, %s113
      %p125 = scmp.eq.s32.totalorder %s30, 1
      %p126 = por %p124, %p125
      %p128 = scmp.ne.s32.totalorder %s113, %s127
      %p129 = scmp.eq.s32.totalorder %s30, 0
      %p130 = por %p128, %p129
      %s132 = sadd.s32 %s131, 1
      %p135 = scmp.eq.s32.totalorder %s24, 1
      %p136 = scmp.ne.s32.totalorder %s131, %s133
      %p137 = scmp.eq.s32.totalorder %s24, 0
      %p138 = por %p136, %p137
      %p139 = scmp.ne.s32.totalorder %s131, %s133
      %p140 = scmp.eq.s32.totalorder %s29, 1
      %p141 = por %p139, %p140
      %p142 = scmp.ne.s32.totalorder %s133, %s134
      %p143 = scmp.eq.s32.totalorder %s29, 0
      %p144 = por %p142, %p143
      %p145 = scmp.ne.s32.totalorder %s133, %s134
      %p146 = scmp.eq.s32.totalorder %s30, 1
      %p147 = por %p145, %p146
      %p149 = scmp.ne.s32.totalorder %s134, %s148
      %p150 = scmp.eq.s32.totalorder %s30, 0
      %p151 = por %p149, %p150
      %s153 = sadd.s32 %s152, 1
      %p156 = scmp.eq.s32.totalorder %s24, 1
      %p157 = scmp.ne.s32.totalorder %s152, %s154
      %p158 = scmp.eq.s32.totalorder %s24, 0
      %p159 = por %p157, %p158
      %p160 = scmp.ne.s32.totalorder %s152, %s154
      %p161 = scmp.eq.s32.totalorder %s29, 1
      %p162 = por %p160, %p161
      %p163 = scmp.ne.s32.totalorder %s154, %s155
      %p164 = scmp.eq.s32.totalorder %s29, 0
      %p165 = por %p163, %p164
      %p166 = scmp.ne.s32.totalorder %s154, %s155
      %p167 = scmp.eq.s32.totalorder %s30, 1
      %p168 = por %p166, %p167
      %p170 = scmp.ne.s32.totalorder %s155, %s169
      %p171 = scmp.eq.s32.totalorder %s30, 0
      %p172 = por %p170, %p171
      %s174 = sadd.s32 %s173, 1
      %p177 = scmp.eq.s32.totalorder %s24, 1
      %p178 = scmp.ne.s32.totalorder %s173, %s175
      %p179 = scmp.eq.s32.totalorder %s24, 0
      %p180 = por %p178, %p179
      %p181 = scmp.ne.s32.totalorder %s173, %s175
      %p182 = scmp.eq.s32.totalorder %s29, 1
      %p183 = por %p181, %p182
      %p184 = scmp.ne.s32.totalorder %s175, %s176
      %p185 = scmp.eq.s32.totalorder %s29, 0
      %p186 = por %p184, %p185
      %p187 = scmp.ne.s32.totalorder %s175, %s176
      %p188 = scmp.eq.s32.totalorder %s30, 1
      %p189 = por %p187, %p188
      %p191 = scmp.ne.s32.totalorder %s176, %s190
      %p192 = scmp.eq.s32.totalorder %s30, 0
      %p193 = por %p191, %p192
      %s195 = sadd.s32 %s194, 1
      %p198 = scmp.eq.s32.totalorder %s24, 1
      %p199 = scmp.ne.s32.totalorder %s194, %s196
      %p200 = scmp.eq.s32.totalorder %s24, 0
      %p201 = por %p199, %p200
      %p202 = scmp.ne.s32.totalorder %s194, %s196
      %p203 = scmp.eq.s32.totalorder %s29, 1
      %p204 = por %p202, %p203
      %p205 = scmp.ne.s32.totalorder %s196, %s197
      %p206 = scmp.eq.s32.totalorder %s29, 0
      %p207 = por %p205, %p206
      %p208 = scmp.ne.s32.totalorder %s196, %s197
      %p209 = scmp.eq.s32.totalorder %s30, 1
      %p210 = por %p208, %p209
      %p212 = scmp.ne.s32.totalorder %s197, %s211
      %p213 = scmp.eq.s32.totalorder %s30, 0
      %p214 = por %p212, %p213
      %s216 = sadd.s32 %s215, 1
      %p219 = scmp.eq.s32.totalorder %s24, 1
      %p220 = scmp.ne.s32.totalorder %s215, %s217
      %p221 = scmp.eq.s32.totalorder %s24, 0
      %p222 = por %p220, %p221
      %p223 = scmp.ne.s32.totalorder %s215, %s217
      %p224 = scmp.eq.s32.totalorder %s29, 1
      %p225 = por %p223, %p224
      %p226 = scmp.ne.s32.totalorder %s217, %s218
      %p227 = scmp.eq.s32.totalorder %s29, 0
      %p228 = por %p226, %p227
      %p229 = scmp.ne.s32.totalorder %s217, %s218
      %p230 = scmp.eq.s32.totalorder %s30, 1
      %p231 = por %p229, %p230
      %p233 = scmp.ne.s32.totalorder %s218, %s232
      %p234 = scmp.eq.s32.totalorder %s30, 0
      %p235 = por %p233, %p234
      %s237 = sadd.s32 %s236, 1
      %p240 = scmp.eq.s32.totalorder %s24, 1
      %p241 = scmp.ne.s32.totalorder %s236, %s238
      %p242 = scmp.eq.s32.totalorder %s24, 0
      %p243 = por %p241, %p242
      %p244 = scmp.ne.s32.totalorder %s236, %s238
      %p245 = scmp.eq.s32.totalorder %s29, 1
      %p246 = por %p244, %p245
      %p247 = scmp.ne.s32.totalorder %s238, %s239
      %p248 = scmp.eq.s32.totalorder %s29, 0
      %p249 = por %p247, %p248
      %p250 = scmp.ne.s32.totalorder %s238, %s239
      %p251 = scmp.eq.s32.totalorder %s30, 1
      %p252 = por %p250, %p251
      %p254 = scmp.ne.s32.totalorder %s239, %s253
      %p255 = scmp.eq.s32.totalorder %s30, 0
      %p256 = por %p254, %p255
      %s258 = sadd.s32 %s257, 1
      %p261 = scmp.eq.s32.totalorder %s24, 1
      %p262 = scmp.ne.s32.totalorder %s257, %s259
      %p263 = scmp.eq.s32.totalorder %s24, 0
      %p264 = por %p262, %p263
      %p265 = scmp.ne.s32.totalorder %s257, %s259
      %p266 = scmp.eq.s32.totalorder %s29, 1
      %p267 = por %p265, %p266
      %p268 = scmp.ne.s32.totalorder %s259, %s260
      %p269 = scmp.eq.s32.totalorder %s29, 0
      %p270 = por %p268, %p269
      %p271 = scmp.ne.s32.totalorder %s259, %s260
      %p272 = scmp.eq.s32.totalorder %s30, 1
      %p273 = por %p271, %p272
      %p275 = scmp.ne.s32.totalorder %s260, %s274
      %p276 = scmp.eq.s32.totalorder %s30, 0
      %p277 = por %p275, %p276
      %s279 = sadd.s32 %s278, 1
      %p282 = scmp.eq.s32.totalorder %s24, 1
      %p283 = scmp.ne.s32.totalorder %s278, %s280
      %p284 = scmp.eq.s32.totalorder %s24, 0
      %p285 = por %p283, %p284
      %p286 = scmp.ne.s32.totalorder %s278, %s280
      %p287 = scmp.eq.s32.totalorder %s29, 1
      %p288 = por %p286, %p287
      %p289 = scmp.ne.s32.totalorder %s280, %s281
      %p290 = scmp.eq.s32.totalorder %s29, 0
      %p291 = por %p289, %p290
      %p292 = scmp.ne.s32.totalorder %s280, %s281
      %p293 = scmp.eq.s32.totalorder %s30, 1
      %p294 = por %p292, %p293
      %p296 = scmp.ne.s32.totalorder %s281, %s295
      %p297 = scmp.eq.s32.totalorder %s30, 0
      %p298 = por %p296, %p297
      %s300 = sadd.s32 %s299, 1
      %p303 = scmp.eq.s32.totalorder %s24, 1
      %p304 = scmp.ne.s32.totalorder %s299, %s301
      %p305 = scmp.eq.s32.totalorder %s24, 0
      %p306 = por %p304, %p305
      %p307 = scmp.ne.s32.totalorder %s299, %s301
      %p308 = scmp.eq.s32.totalorder %s29, 1
      %p309 = por %p307, %p308
      %p310 = scmp.ne.s32.totalorder %s301, %s302
      %p311 = scmp.eq.s32.totalorder %s29, 0
      %p312 = por %p310, %p311
      %p313 = scmp.ne.s32.totalorder %s301, %s302
      %p314 = scmp.eq.s32.totalorder %s30, 1
      %p315 = por %p313, %p314
      %p317 = scmp.ne.s32.totalorder %s302, %s316
      %p318 = scmp.eq.s32.totalorder %s30, 0
      %p319 = por %p317, %p318
      %s320 = ssub.s32 %s24, %s31
      %p321 = scmp.eq.s32.totalorder %s320, 0
      %s323 = sadd.s32 %s322, 1
      %s324 = scalar_select %p321, %s322, %s323
      %p327 = pneg %p321
      %p328 = scmp.eq.s32.totalorder %s24, 1
      %p329 = por %p327, %p328
      %p330 = scmp.ne.s32.totalorder %s322, %s325
      %p331 = scmp.eq.s32.totalorder %s24, 0
      %p332 = por %p330, %p331
      %p333 = scmp.ne.s32.totalorder %s322, %s325
      %p334 = scmp.eq.s32.totalorder %s29, 1
      %p335 = por %p333, %p334
      %p336 = scmp.ne.s32.totalorder %s325, %s326
      %p337 = scmp.eq.s32.totalorder %s29, 0
      %p338 = por %p336, %p337
      %p339 = scmp.ne.s32.totalorder %s325, %s326
      %p340 = scmp.eq.s32.totalorder %s30, 1
      %p341 = por %p339, %p340
      %p343 = scmp.ne.s32.totalorder %s326, %s342
      %p344 = scmp.eq.s32.totalorder %s30, 0
      %p345 = por %p343, %p344
      %p346 = scmp.le.s32.totalorder 1, %s24
      %p347 = scmp.lt.s32.totalorder %s24, 3
      %p348 = pnand %p346, %p347
      %p349 = pneg %p348
      // Predicated region
      $region9: #{tpu_custom_call.1} parent=5 // pred_check
        _
      $region10: #{tpu_custom_call.1} parent=5 // pred_check_branch
        %351 = sbr.rel (%p348) target = $region12
      $region11: #{tpu_custom_call.1} parent=5 // pred_region
        %s352 = ssub.s32 %s24, 1
        // Predicated region
        $region13: #{tpu_custom_call.1} parent=11 // pred_check
          %p353 = pneg %p123
        $region14: #{tpu_custom_call.1} parent=11 // pred_check_branch
          %355 = sbr.rel (%p353) target = $region16
        $region15: #{tpu_custom_call.1} parent=11 // pred_region
          %s357 = ssub.s32 128, 128
          %358 = vsyncadd [#allocation3], %s357
          %s359 = sshll.u32 [#allocation2], 4
          %s360 = int_to_ptr.vmem [resolvable:$true] %s359
          %365 = dma.hbm_to_vmem [thread:$0]  %s3, 128, %s360, [#allocation3], 64, 64, 4
        $region16: #{tpu_custom_call.1} parent=11 // pred_fallthru
          _
        // Predicated region
        $region17: #{tpu_custom_call.1} parent=11 // pred_check
          %p366 = pneg %p144
        $region18: #{tpu_custom_call.1} parent=11 // pred_check_branch
          %368 = sbr.rel (%p366) target = $region20
        $region19: #{tpu_custom_call.1} parent=11 // pred_region
          %s370 = ssub.s32 16, 16
          %371 = vsyncadd [#allocation6], %s370
          %s373 = sshll.u32 [#allocation5], 4
          %s374 = int_to_ptr.vmem [resolvable:$true] %s373
          %376 = dma.hbm_to_vmem [thread:$0]  %s4, 16, %s374, [#allocation6]
        $region20: #{tpu_custom_call.1} parent=11 // pred_fallthru
          _
        // Predicated region
        $region21: #{tpu_custom_call.1} parent=11 // pred_check
          %p377 = pneg %p165
        $region22: #{tpu_custom_call.1} parent=11 // pred_check_branch
          %379 = sbr.rel (%p377) target = $region24
        $region23: #{tpu_custom_call.1} parent=11 // pred_region
          _
        $region24: #{tpu_custom_call.1} parent=11 // pred_fallthru
          _
        // Predicated region
        $region25: #{tpu_custom_call.1} parent=11 // pred_check
          %p380 = pneg %p186
        $region26: #{tpu_custom_call.1} parent=11 // pred_check_branch
          %382 = sbr.rel (%p380) target = $region28
        $region27: #{tpu_custom_call.1} parent=11 // pred_region
          _
        $region28: #{tpu_custom_call.1} parent=11 // pred_fallthru
          _
        // Predicated region
        $region29: #{tpu_custom_call.1} parent=11 // pred_check
          %p383 = pneg %p207
        $region30: #{tpu_custom_call.1} parent=11 // pred_check_branch
          %385 = sbr.rel (%p383) target = $region32
        $region31: #{tpu_custom_call.1} parent=11 // pred_region
          _
        $region32: #{tpu_custom_call.1} parent=11 // pred_fallthru
          _
        // Predicated region
        $region33: #{tpu_custom_call.1} parent=11 // pred_check
          %p386 = pneg %p228
        $region34: #{tpu_custom_call.1} parent=11 // pred_check_branch
          %388 = sbr.rel (%p386) target = $region36
        $region35: #{tpu_custom_call.1} parent=11 // pred_region
          _
        $region36: #{tpu_custom_call.1} parent=11 // pred_fallthru
          _
        // Predicated region
        $region37: #{tpu_custom_call.1} parent=11 // pred_check
          %p389 = pneg %p249
        $region38: #{tpu_custom_call.1} parent=11 // pred_check_branch
          %391 = sbr.rel (%p389) target = $region40
        $region39: #{tpu_custom_call.1} parent=11 // pred_region
          _
        $region40: #{tpu_custom_call.1} parent=11 // pred_fallthru
          _
        // Predicated region
        $region41: #{tpu_custom_call.1} parent=11 // pred_check
          %p392 = pneg %p270
        $region42: #{tpu_custom_call.1} parent=11 // pred_check_branch
          %394 = sbr.rel (%p392) target = $region44
        $region43: #{tpu_custom_call.1} parent=11 // pred_region
          _
        $region44: #{tpu_custom_call.1} parent=11 // pred_fallthru
          _
        // Predicated region
        $region45: #{tpu_custom_call.1} parent=11 // pred_check
          %p395 = pneg %p291
        $region46: #{tpu_custom_call.1} parent=11 // pred_check_branch
          %397 = sbr.rel (%p395) target = $region48
        $region47: #{tpu_custom_call.1} parent=11 // pred_region
          _
        $region48: #{tpu_custom_call.1} parent=11 // pred_fallthru
          _
        // Predicated region
        $region49: #{tpu_custom_call.1} parent=11 // pred_check
          %p398 = pneg %p312
        $region50: #{tpu_custom_call.1} parent=11 // pred_check_branch
          %400 = sbr.rel (%p398) target = $region52
        $region51: #{tpu_custom_call.1} parent=11 // pred_region
          _
        $region52: #{tpu_custom_call.1} parent=11 // pred_fallthru
          _
      $region12: #{tpu_custom_call.1} parent=5 // pred_fallthru
        _
      %p401 = scmp.lt.s32.totalorder %s24, 2
      // Predicated region
      $region53: #{tpu_custom_call.1} parent=5 // pred_check
        %p402 = pneg %p401
      $region54: #{tpu_custom_call.1} parent=5 // pred_check_branch
        %404 = sbr.rel (%p402) target = $region56
      $region55: #{tpu_custom_call.1} parent=5 // pred_region
        // Predicated region
        $region57: #{tpu_custom_call.1} parent=55 // pred_check
          %p405 = pneg %p44
        $region58: #{tpu_custom_call.1} parent=55 // pred_check_branch
          %407 = sbr.rel (%p405) target = $region60
        $region59: #{tpu_custom_call.1} parent=55 // pred_region
          %p408 = scmp.lt.s32.totalorder %s24, 1
          %s409 = scalar_select %p408, %s24, 1
          %s410 = smul.addr %s409, 16
          %s411 = smul.addr %s410, 4
          %s412 = scalar_lea.vmem %s0, %s411
        $region60: #{tpu_custom_call.1} parent=55 // pred_fallthru
          _
        // Predicated region
        $region61: #{tpu_custom_call.1} parent=55 // pred_check
          %p413 = pneg %p70
        $region62: #{tpu_custom_call.1} parent=55 // pred_check_branch
          %415 = sbr.rel (%p413) target = $region64
        $region63: #{tpu_custom_call.1} parent=55 // pred_region
          %p416 = scmp.lt.s32.totalorder %s24, 1
          %s417 = scalar_select %p416, %s24, 1
          %s418 = smul.addr %s417, 2
          %s419 = smul.addr %s418, 4
          %s420 = scalar_lea.vmem %s1, %s419
        $region64: #{tpu_custom_call.1} parent=55 // pred_fallthru
          _
        // Predicated region
        $region65: #{tpu_custom_call.1} parent=55 // pred_check
          %p421 = pneg %p96
        $region66: #{tpu_custom_call.1} parent=55 // pred_check_branch
          %423 = sbr.rel (%p421) target = $region68
        $region67: #{tpu_custom_call.1} parent=55 // pred_region
          %p424 = scmp.lt.s32.totalorder %s24, 1
          %s425 = scalar_select %p424, %s24, 1
          %s426 = scalar_lea.vmem %s2, %s425
        $region68: #{tpu_custom_call.1} parent=55 // pred_fallthru
          _
      $region56: #{tpu_custom_call.1} parent=5 // pred_fallthru
        _
      %p427 = scmp.le.s32.totalorder 1, %s24
      %p428 = scmp.lt.s32.totalorder %s24, 3
      %p429 = pnand %p427, %p428
      %p430 = pneg %p429
      // Predicated region
      $region69: #{tpu_custom_call.1} parent=5 // pred_check
        _
      $region70: #{tpu_custom_call.1} parent=5 // pred_check_branch
        %432 = sbr.rel (%p429) target = $region72
      $region71: #{tpu_custom_call.1} parent=5 // pred_region
        %s433 = ssub.s32 %s24, 1
        // Predicated region
        $region73: #{tpu_custom_call.1} parent=71 // pred_check
          %p434 = pneg %p123
        $region74: #{tpu_custom_call.1} parent=71 // pred_check_branch
          %436 = sbr.rel (%p434) target = $region76
        $region75: #{tpu_custom_call.1} parent=71 // pred_region
          %437 = dma.done [#allocation3], 128
        $region76: #{tpu_custom_call.1} parent=71 // pred_fallthru
          _
        // Predicated region
        $region77: #{tpu_custom_call.1} parent=71 // pred_check
          %p438 = pneg %p144
        $region78: #{tpu_custom_call.1} parent=71 // pred_check_branch
          %440 = sbr.rel (%p438) target = $region80
        $region79: #{tpu_custom_call.1} parent=71 // pred_region
          %441 = dma.done [#allocation6], 16
        $region80: #{tpu_custom_call.1} parent=71 // pred_fallthru
          _
        %p442 = scmp.lt.s32.totalorder %s29, 1
        %s443 = scalar_select %p442, %s29, 1
        %s444 = smul.addr %s443, 16
        %s445 = smul.addr %s444, 4
        %s446 = scalar_lea.vmem %s0, %s445
        %p447 = pneg %p50
        %p448 = pneg %p47
        %p449 = scmp.lt.s32.totalorder %s29, 1
        %s450 = scalar_select %p449, %s29, 1
        %s451 = smul.addr %s450, 2
        %s452 = smul.addr %s451, 4
        %s453 = scalar_lea.vmem %s1, %s452
        %p454 = pneg %p76
        %p455 = pneg %p73
        %p456 = scmp.lt.s32.totalorder %s29, 1
        %s457 = scalar_select %p456, %s29, 1
        %s458 = scalar_lea.vmem %s2, %s457
        %p459 = pneg %p102
        %p460 = pneg %p99
        %p461 = pneg %p123
        %p462 = pneg %p120
        %p463 = pneg %p144
        %p464 = pneg %p141
        %p465 = pneg %p165
        %p466 = pneg %p162
        %p467 = pneg %p186
        %p468 = pneg %p183
        %p469 = pneg %p207
        %p470 = pneg %p204
        %p471 = pneg %p228
        %p472 = pneg %p225
        %p473 = pneg %p249
        %p474 = pneg %p246
        %p475 = pneg %p270
        %p476 = pneg %p267
        %p477 = pneg %p291
        %p478 = pneg %p288
        %p479 = pneg %p312
        %p480 = pneg %p309
        %p481 = pneg %p338
        %p482 = pneg %p335
        %s483 = sand.u32 %s325, 1
        %s484 = scalar_lea.sflag [#allocation4], %s483
        %s485 = sand.u32 %s325, 1
        %s486 = smul.addr %s485, 16
        %s487 = scalar_lea.vmem [#allocation7], %s486
        %p488 = scmp.lt.s32.totalorder %s29, 1
        %s489 = scalar_select %p488, %s29, 1
        %s490 = smul.addr %s489, 16
        %s491 = smul.addr %s490, 4
        %s492 = scalar_lea.vmem %s0, %s491
        %p493 = scmp.lt.s32.totalorder %s29, 1
        %s494 = scalar_select %p493, %s29, 1
        %s495 = smul.addr %s494, 2
        %s496 = smul.addr %s495, 4
        %s497 = scalar_lea.vmem %s1, %s496
        %p498 = scmp.lt.s32.totalorder %s29, 1
        %s499 = scalar_select %p498, %s29, 1
        %s500 = scalar_lea.vmem %s2, %s499
        %v502 = vld [vmem:[%s497] sm:$0xf]
        %v503 = vld [vmem:[%s497 + $0x4] sm:$0xf]
        %v504 = vld [vmem:[%s492] sm:$0xf]
        %v505 = vld [vmem:[%s492 + $0x4] sm:$0xf]
        %v506 = vld [vmem:[%s492 + $0x8] sm:$0xf]
        %v507 = vld [vmem:[%s492 + $0xc] sm:$0xf]
        %v508 = vld [vmem:[%s492 + $0x10] sm:$0xf]
        %v509 = vld [vmem:[%s492 + $0x14] sm:$0xf]
        %v510 = vld [vmem:[%s492 + $0x18] sm:$0xf]
        %v511 = vld [vmem:[%s492 + $0x1c] sm:$0xf]
        %v512 = vld [vmem:[%s492 + $0x20] sm:$0xf]
        %v513 = vld [vmem:[%s492 + $0x24] sm:$0xf]
        %v514 = vld [vmem:[%s492 + $0x28] sm:$0xf]
        %v515 = vld [vmem:[%s492 + $0x2c] sm:$0xf]
        %v516 = vld [vmem:[%s492 + $0x30] sm:$0xf]
        %v517 = vld [vmem:[%s492 + $0x34] sm:$0xf]
        %v518 = vld [vmem:[%s492 + $0x38] sm:$0xf]
        %v519 = vld [vmem:[%s492 + $0x3c] sm:$0xf]
        %v520 = vld [vmem:[#allocation2] sm:$0xf]
        %v521 = vld [vmem:[#allocation2 + $0x4] sm:$0xf]
        %v522 = vld [vmem:[#allocation5] sm:$0x1]
        %v524 = vlaneseq
        %v525 = vshrl.u32 %v524, 7
        %v526 = vsub.s32 0, %v525
        %v527 = vrot.slane %v522, %v526
        %v531 = vunpack.c.l.b16 %v502
        %v532 = vunpack.c.l.b16 %v503
        %v533 = vpack.c.b16 %v532, %v531
        %v536 = vunpack.c.l.b16 %v520
        %v537 = vunpack.c.l.b16 %v521
        %v538 = vpack.c.b16 %v537, %v536
        %vm540 = vcmask 130048
        %v542 = vsel %vm540, %v533, 0
        %544 = vmatprep.subr.bf16.mxu0 0
        %545 = vmatpush1.bf16.msra.mxu0 %v538
        %546 = vmatprep.subr.bf16.mxu0 0
        %547 = vmatpush1.bf16.msra.mxu0 0
        %548 = vmatprep.subr.bf16.mxu0 0
        %549 = vmatpush1.bf16.msra.mxu0 0
        %550 = vmatprep.subr.bf16.mxu0 0
        %551 = vmatpush1.bf16.msra.mxu0 0
        %552 = vmatprep.subr.bf16.mxu0 0
        %553 = vmatpush1.bf16.msra.mxu0 0
        %554 = vmatprep.subr.bf16.mxu0 0
        %555 = vmatpush1.bf16.msra.mxu0 0
        %556 = vmatprep.subr.bf16.mxu0 0
        %557 = vmatpush1.bf16.msra.mxu0 0
        %558 = vmatprep.subr.bf16.mxu0 0
        %559 = vmatpush1.bf16.msra.mxu0 0
        %560 = vmatprep.subr.bf16.mxu0 0
        %561 = vmatpush1.bf16.msra.mxu0 0
        %562 = vmatprep.subr.bf16.mxu0 0
        %563 = vmatpush1.bf16.msra.mxu0 0
        %564 = vmatprep.subr.bf16.mxu0 0
        %565 = vmatpush1.bf16.msra.mxu0 0
        %566 = vmatprep.subr.bf16.mxu0 0
        %567 = vmatpush1.bf16.msra.mxu0 0
        %568 = vmatprep.subr.bf16.mxu0 0
        %569 = vmatpush1.bf16.msra.mxu0 0
        %570 = vmatprep.subr.bf16.mxu0 0
        %571 = vmatpush1.bf16.msra.mxu0 0
        %572 = vmatprep.subr.bf16.mxu0 0
        %573 = vmatpush1.bf16.msra.mxu0 0
        %574 = vmatprep.subr.bf16.mxu0 0
        %575 = vmatpush1.bf16.msra.mxu0 0
        %576 = vmatprep.mubr.bf16.mxu0 0
        %577 = vmatmul.mubr.bf16.gmra.mrb[0].mxu0 %v542
        %v578 = vpop.f32.mrb[0].mxu0
        %v579 = vadd.f32 %v527, %v578
        %v580 = vpop.f32.mrb[0].mxu0
        %v581 = vpop.f32.mrb[0].mxu0
        %v582 = vadd.f32 %v527, %v581
        %v583 = vpop.f32.mrb[0].mxu0
        %584 = vdwg.mxu0
        %v585 = vld [vmem:[%s5] sm:$0xff]
        %v586 = vld [vmem:[%s5 + $0x8] sm:$0xff]
        %v587 = vld [vmem:[%s6] sm:$0x3]
        %v589 = vlaneseq
        %v590 = vshrl.u32 %v589, 7
        %v591 = vsub.s32 0, %v590
        %v592 = vrot.slane %v587, %v591
        %v593 = vlaneseq
        %v594 = vshrl.u32 %v593, 7
        %v595 = vsub.s32 1, %v594
        %v596 = vrot.slane %v587, %v595
        %v615 = vunpack.c.l.b16 %v504
        %v616 = vunpack.c.l.b16 %v505
        %v617 = vunpack.c.l.b16 %v506
        %v618 = vunpack.c.l.b16 %v507
        %v619 = vunpack.c.l.b16 %v508
        %v620 = vunpack.c.l.b16 %v509
        %v621 = vunpack.c.l.b16 %v510
        %v622 = vunpack.c.l.b16 %v511
        %v623 = vunpack.c.l.b16 %v512
        %v624 = vunpack.c.l.b16 %v513
        %v625 = vunpack.c.l.b16 %v514
        %v626 = vunpack.c.l.b16 %v515
        %v627 = vunpack.c.l.b16 %v516
        %v628 = vunpack.c.l.b16 %v517
        %v629 = vunpack.c.l.b16 %v518
        %v630 = vunpack.c.l.b16 %v519
        %v631 = vpack.c.b16 %v616, %v615
        %v632 = vpack.c.b16 %v618, %v617
        %v633 = vpack.c.b16 %v620, %v619
        %v634 = vpack.c.b16 %v622, %v621
        %v635 = vpack.c.b16 %v624, %v623
        %v636 = vpack.c.b16 %v626, %v625
        %v637 = vpack.c.b16 %v628, %v627
        %v638 = vpack.c.b16 %v630, %v629
        %v641 = vunpack.c.l.b16 %v585
        %v642 = vunpack.c.h.b16 %v585
        %v643 = vunpack.c.l.b16 %v586
        %v644 = vunpack.c.h.b16 %v586
        %v645 = vpack.c.b16 %v643, %v641
        %v646 = vpack.c.b16 %v644, %v642
        %v650 = vsel %vm540, %v631, 0
        %v653 = vsel %vm540, %v632, 0
        %v656 = vsel %vm540, %v633, 0
        %v659 = vsel %vm540, %v634, 0
        %v662 = vsel %vm540, %v635, 0
        %v665 = vsel %vm540, %v636, 0
        %v668 = vsel %vm540, %v637, 0
        %v671 = vsel %vm540, %v638, 0
        %673 = vmatprep.subr.bf16.mxu0 %v646
        %674 = vmatpush1.bf16.msra.mxu0 %v645
        %675 = vmatprep.subr.bf16.mxu0 0
        %676 = vmatpush1.bf16.msra.mxu0 0
        %677 = vmatprep.subr.bf16.mxu0 0
        %678 = vmatpush1.bf16.msra.mxu0 0
        %679 = vmatprep.subr.bf16.mxu0 0
        %680 = vmatpush1.bf16.msra.mxu0 0
        %681 = vmatprep.subr.bf16.mxu0 0
        %682 = vmatpush1.bf16.msra.mxu0 0
        %683 = vmatprep.subr.bf16.mxu0 0
        %684 = vmatpush1.bf16.msra.mxu0 0
        %685 = vmatprep.subr.bf16.mxu0 0
        %686 = vmatpush1.bf16.msra.mxu0 0
        %687 = vmatprep.subr.bf16.mxu0 0
        %688 = vmatpush1.bf16.msra.mxu0 0
        %689 = vmatprep.subr.bf16.mxu0 0
        %690 = vmatpush1.bf16.msra.mxu0 0
        %691 = vmatprep.subr.bf16.mxu0 0
        %692 = vmatpush1.bf16.msra.mxu0 0
        %693 = vmatprep.subr.bf16.mxu0 0
        %694 = vmatpush1.bf16.msra.mxu0 0
        %695 = vmatprep.subr.bf16.mxu0 0
        %696 = vmatpush1.bf16.msra.mxu0 0
        %697 = vmatprep.subr.bf16.mxu0 0
        %698 = vmatpush1.bf16.msra.mxu0 0
        %699 = vmatprep.subr.bf16.mxu0 0
        %700 = vmatpush1.bf16.msra.mxu0 0
        %701 = vmatprep.subr.bf16.mxu0 0
        %702 = vmatpush1.bf16.msra.mxu0 0
        %703 = vmatprep.subr.bf16.mxu0 0
        %704 = vmatpush1.bf16.msra.mxu0 0
        %705 = vmatprep.mubr.bf16.mxu0 0
        %706 = vmatmul.mubr.bf16.gmra.mrb[0].mxu0 %v650
        %v707 = vpop.f32.mrb[0].mxu0
        %v708 = vadd.f32 %v592, %v707
        %v709 = vpop.f32.mrb[0].mxu0
        %v710 = vadd.f32 %v596, %v709
        %v711 = vpop.f32.mrb[0].mxu0
        %v712 = vadd.f32 %v592, %v711
        %v713 = vpop.f32.mrb[0].mxu0
        %v714 = vadd.f32 %v596, %v713
        %715 = vmatprep.mubr.bf16.mxu0 0
        %716 = vmatmul.mubr.bf16.gmra.mrb[0].mxu0 %v653
        %v717 = vpop.f32.mrb[0].mxu0
        %v718 = vadd.f32 %v592, %v717
        %v719 = vpop.f32.mrb[0].mxu0
        %v720 = vadd.f32 %v596, %v719
        %v721 = vpop.f32.mrb[0].mxu0
        %v722 = vadd.f32 %v592, %v721
        %v723 = vpop.f32.mrb[0].mxu0
        %v724 = vadd.f32 %v596, %v723
        %725 = vmatprep.mubr.bf16.mxu0 0
        %726 = vmatmul.mubr.bf16.gmra.mrb[0].mxu0 %v656
        %v727 = vpop.f32.mrb[0].mxu0
        %v728 = vadd.f32 %v592, %v727
        %v729 = vpop.f32.mrb[0].mxu0
        %v730 = vadd.f32 %v596, %v729
        %v731 = vpop.f32.mrb[0].mxu0
        %v732 = vadd.f32 %v592, %v731
        %v733 = vpop.f32.mrb[0].mxu0
        %v734 = vadd.f32 %v596, %v733
        %735 = vmatprep.mubr.bf16.mxu0 0
        %736 = vmatmul.mubr.bf16.gmra.mrb[0].mxu0 %v659
        %v737 = vpop.f32.mrb[0].mxu0
        %v738 = vadd.f32 %v592, %v737
        %v739 = vpop.f32.mrb[0].mxu0
        %v740 = vadd.f32 %v596, %v739
        %v741 = vpop.f32.mrb[0].mxu0
        %v742 = vadd.f32 %v592, %v741
        %v743 = vpop.f32.mrb[0].mxu0
        %v744 = vadd.f32 %v596, %v743
        %745 = vmatprep.mubr.bf16.mxu0 0
        %746 = vmatmul.mubr.bf16.gmra.mrb[0].mxu0 %v662
        %v747 = vpop.f32.mrb[0].mxu0
        %v748 = vadd.f32 %v592, %v747
        %v749 = vpop.f32.mrb[0].mxu0
        %v750 = vadd.f32 %v596, %v749
        %v751 = vpop.f32.mrb[0].mxu0
        %v752 = vadd.f32 %v592, %v751
        %v753 = vpop.f32.mrb[0].mxu0
        %v754 = vadd.f32 %v596, %v753
        %755 = vmatprep.mubr.bf16.mxu0 0
        %756 = vmatmul.mubr.bf16.gmra.mrb[0].mxu0 %v665
        %v757 = vpop.f32.mrb[0].mxu0
        %v758 = vadd.f32 %v592, %v757
        %v759 = vpop.f32.mrb[0].mxu0
        %v760 = vadd.f32 %v596, %v759
        %v761 = vpop.f32.mrb[0].mxu0
        %v762 = vadd.f32 %v592, %v761
        %v763 = vpop.f32.mrb[0].mxu0
        %v764 = vadd.f32 %v596, %v763
        %765 = vmatprep.mubr.bf16.mxu0 0
        %766 = vmatmul.mubr.bf16.gmra.mrb[0].mxu0 %v668
        %v767 = vpop.f32.mrb[0].mxu0
        %v768 = vadd.f32 %v592, %v767
        %v769 = vpop.f32.mrb[0].mxu0
        %v770 = vadd.f32 %v596, %v769
        %v771 = vpop.f32.mrb[0].mxu0
        %v772 = vadd.f32 %v592, %v771
        %v773 = vpop.f32.mrb[0].mxu0
        %v774 = vadd.f32 %v596, %v773
        %775 = vmatprep.mubr.bf16.mxu0 0
        %776 = vmatmul.mubr.bf16.gmra.mrb[0].mxu0 %v671
        %v777 = vpop.f32.mrb[0].mxu0
        %v778 = vadd.f32 %v592, %v777
        %v779 = vpop.f32.mrb[0].mxu0
        %v780 = vadd.f32 %v596, %v779
        %v781 = vpop.f32.mrb[0].mxu0
        %v782 = vadd.f32 %v592, %v781
        %v783 = vpop.f32.mrb[0].mxu0
        %v784 = vadd.f32 %v596, %v783
        %785 = vdwg.mxu0
        %v786 = vpack.c.bf16 %v582, %v579
        %v787 = vpack.c.bf16 %v712, %v708
        %v788 = vpack.c.bf16 %v722, %v718
        %v789 = vpack.c.bf16 %v732, %v728
        %v790 = vpack.c.bf16 %v742, %v738
        %v791 = vpack.c.bf16 %v752, %v748
        %v792 = vpack.c.bf16 %v762, %v758
        %v793 = vpack.c.bf16 %v772, %v768
        %v794 = vpack.c.bf16 %v782, %v778
        %v795 = vpack.c.bf16 %v714, %v710
        %v796 = vpack.c.bf16 %v724, %v720
        %v797 = vpack.c.bf16 %v734, %v730
        %v798 = vpack.c.bf16 %v744, %v740
        %v799 = vpack.c.bf16 %v754, %v750
        %v800 = vpack.c.bf16 %v764, %v760
        %v801 = vpack.c.bf16 %v774, %v770
        %v802 = vpack.c.bf16 %v784, %v780
        %v803 = vld [vmem:[%s500] sm:$0x1]
        %v805 = vlaneseq
        %v806 = vshrl.u32 %v805, 7
        %v807 = vsub.s32 0, %v806
        %v808 = vrot.slane %v803, %v807
        %810 = vmatprep.subr.bf16.mxu0 0
        %811 = vmatpush1.bf16.xpose.msra.mxu0 %v787
        %812 = vmatprep.subr.bf16.mxu0 0
        %813 = vmatpush1.bf16.xpose.msra.mxu0 %v788
        %814 = vmatprep.subr.bf16.mxu0 0
        %815 = vmatpush1.bf16.xpose.msra.mxu0 %v789
        %816 = vmatprep.subr.bf16.mxu0 0
        %817 = vmatpush1.bf16.xpose.msra.mxu0 %v790
        %818 = vmatprep.subr.bf16.mxu0 0
        %819 = vmatpush1.bf16.xpose.msra.mxu0 %v791
        %820 = vmatprep.subr.bf16.mxu0 0
        %821 = vmatpush1.bf16.xpose.msra.mxu0 %v792
        %822 = vmatprep.subr.bf16.mxu0 0
        %823 = vmatpush1.bf16.xpose.msra.mxu0 %v793
        %824 = vmatprep.subr.bf16.mxu0 0
        %825 = vmatpush1.bf16.xpose.msra.mxu0 %v794
        %826 = vmatprep.subr.bf16.mxu0 0
        %827 = vmatpush1.bf16.xpose.msra.mxu0 0
        %828 = vmatprep.subr.bf16.mxu0 0
        %829 = vmatpush1.bf16.xpose.msra.mxu0 0
        %830 = vmatprep.subr.bf16.mxu0 0
        %831 = vmatpush1.bf16.xpose.msra.mxu0 0
        %832 = vmatprep.subr.bf16.mxu0 0
        %833 = vmatpush1.bf16.xpose.msra.mxu0 0
        %834 = vmatprep.subr.bf16.mxu0 0
        %835 = vmatpush1.bf16.xpose.msra.mxu0 0
        %836 = vmatprep.subr.bf16.mxu0 0
        %837 = vmatpush1.bf16.xpose.msra.mxu0 0
        %838 = vmatprep.subr.bf16.mxu0 0
        %839 = vmatpush1.bf16.xpose.msra.mxu0 0
        %840 = vmatprep.subr.bf16.mxu0 0
        %841 = vmatpush1.bf16.xpose.msra.mxu0 0
        %842 = vmatprep.mubr.bf16.mxu0 0
        %843 = vmatmul.mubr.bf16.gmra.mrb[0].mxu0 %v786
        %v844 = vpop.f32.mrb[0].mxu0
        %v845 = vadd.f32 %v808, %v844
        %v846 = vpop.f32.mrb[0].mxu0
        %v847 = vpop.f32.mrb[0].mxu0
        %v848 = vadd.f32 %v808, %v847
        %v849 = vpop.f32.mrb[0].mxu0
        %850 = vdwg.mxu0
        %851 = vmax.xlane.f32.xlu0 %v845
        %v852 = vpop.xlane.xlu0 %851
        %853 = vmax.xlane.f32.xlu0 %v848
        %v854 = vpop.xlane.xlu0 %853
        %v855 = vsub.f32 %v845, %v852
        %v856 = vsub.f32 %v848, %v854
        %v857 = vmul.f32 %v855, 1.442695
        %v858 = vpow.pop %v857
        %v859 = vmul.f32 %v856, 1.442695
        %v860 = vpow.pop %v859
        %861 = vadd.xlane.f32.xlu0 %v858
        %v862 = vpop.xlane.xlu0 %861
        %863 = vadd.xlane.f32.xlu0 %v860
        %v864 = vpop.xlane.xlu0 %863
        %v865 = vrcp.pop %v862
        %v866 = vrcp.pop %v864
        %v867 = vmul.f32 %v858, %v865
        %v868 = vmul.f32 %v860, %v866
        %v869 = vpack.c.bf16 %v868, %v867
        %870 = vmatprep.subr.bf16.mxu0 0
        %871 = vmatpush1.bf16.msra.mxu0 %v795
        %872 = vmatprep.subr.bf16.mxu0 0
        %873 = vmatpush1.bf16.msra.mxu0 %v796
        %874 = vmatprep.subr.bf16.mxu0 0
        %875 = vmatpush1.bf16.msra.mxu0 %v797
        %876 = vmatprep.subr.bf16.mxu0 0
        %877 = vmatpush1.bf16.msra.mxu0 %v798
        %878 = vmatprep.subr.bf16.mxu0 0
        %879 = vmatpush1.bf16.msra.mxu0 %v799
        %880 = vmatprep.subr.bf16.mxu0 0
        %881 = vmatpush1.bf16.msra.mxu0 %v800
        %882 = vmatprep.subr.bf16.mxu0 0
        %883 = vmatpush1.bf16.msra.mxu0 %v801
        %884 = vmatprep.subr.bf16.mxu0 0
        %885 = vmatpush1.bf16.msra.mxu0 %v802
        %886 = vmatprep.subr.bf16.mxu0 0
        %887 = vmatpush1.bf16.msra.mxu0 0
        %888 = vmatprep.subr.bf16.mxu0 0
        %889 = vmatpush1.bf16.msra.mxu0 0
        %890 = vmatprep.subr.bf16.mxu0 0
        %891 = vmatpush1.bf16.msra.mxu0 0
        %892 = vmatprep.subr.bf16.mxu0 0
        %893 = vmatpush1.bf16.msra.mxu0 0
        %894 = vmatprep.subr.bf16.mxu0 0
        %895 = vmatpush1.bf16.msra.mxu0 0
        %896 = vmatprep.subr.bf16.mxu0 0
        %897 = vmatpush1.bf16.msra.mxu0 0
        %898 = vmatprep.subr.bf16.mxu0 0
        %899 = vmatpush1.bf16.msra.mxu0 0
        %900 = vmatprep.subr.bf16.mxu0 0
        %901 = vmatpush1.bf16.msra.mxu0 0
        %902 = vmatprep.mubr.bf16.mxu0 0
        %903 = vmatmul.mubr.bf16.gmra.mrb[0].mxu0 %v869
        %v904 = vpop.f32.mrb[0].mxu0
        %v905 = vadd.f32 0.0, %v904
        %v906 = vpop.f32.mrb[0].mxu0
        %v907 = vpop.f32.mrb[0].mxu0
        %v908 = vadd.f32 0.0, %v907
        %v909 = vpop.f32.mrb[0].mxu0
        %910 = vdwg.mxu0
        %v911 = vpack.c.bf16 %v908, %v905
        %v912 = vld [vmem:[%s7] sm:$0xf]
        %v913 = vld [vmem:[%s7 + $0x4] sm:$0xf]
        %v914 = vld [vmem:[%s7 + $0x8] sm:$0xf]
        %v915 = vld [vmem:[%s7 + $0xc] sm:$0xf]
        %v916 = vld [vmem:[%s7 + $0x10] sm:$0xf]
        %v917 = vld [vmem:[%s7 + $0x14] sm:$0xf]
        %v918 = vld [vmem:[%s7 + $0x18] sm:$0xf]
        %v919 = vld [vmem:[%s7 + $0x1c] sm:$0xf]
        %v920 = vld [vmem:[%s7 + $0x20] sm:$0xf]
        %v921 = vld [vmem:[%s7 + $0x24] sm:$0xf]
        %v922 = vld [vmem:[%s7 + $0x28] sm:$0xf]
        %v923 = vld [vmem:[%s7 + $0x2c] sm:$0xf]
        %v924 = vld [vmem:[%s7 + $0x30] sm:$0xf]
        %v925 = vld [vmem:[%s7 + $0x34] sm:$0xf]
        %v926 = vld [vmem:[%s7 + $0x38] sm:$0xf]
        %v927 = vld [vmem:[%s7 + $0x3c] sm:$0xf]
        %v928 = vld [vmem:[%s8] sm:$0x1]
        %v930 = vlaneseq
        %v931 = vshrl.u32 %v930, 7
        %v932 = vsub.s32 0, %v931
        %v933 = vrot.slane %v928, %v932
        %v951 = vunpack.c.l.b16 %v912
        %v952 = vunpack.c.l.b16 %v913
        %v953 = vunpack.c.l.b16 %v914
        %v954 = vunpack.c.l.b16 %v915
        %v955 = vunpack.c.l.b16 %v916
        %v956 = vunpack.c.l.b16 %v917
        %v957 = vunpack.c.l.b16 %v918
        %v958 = vunpack.c.l.b16 %v919
        %v959 = vunpack.c.l.b16 %v920
        %v960 = vunpack.c.l.b16 %v921
        %v961 = vunpack.c.l.b16 %v922
        %v962 = vunpack.c.l.b16 %v923
        %v963 = vunpack.c.l.b16 %v924
        %v964 = vunpack.c.l.b16 %v925
        %v965 = vunpack.c.l.b16 %v926
        %v966 = vunpack.c.l.b16 %v927
        %v967 = vpack.c.b16 %v952, %v951
        %v968 = vpack.c.b16 %v954, %v953
        %v969 = vpack.c.b16 %v956, %v955
        %v970 = vpack.c.b16 %v958, %v957
        %v971 = vpack.c.b16 %v960, %v959
        %v972 = vpack.c.b16 %v962, %v961
        %v973 = vpack.c.b16 %v964, %v963
        %v974 = vpack.c.b16 %v966, %v965
        %983 = vmatprep.subr.bf16.mxu0 0
        %984 = vmatpush1.bf16.msra.mxu0 %v967
        %985 = vmatprep.subr.bf16.mxu0 0
        %986 = vmatpush1.bf16.msra.mxu0 %v968
        %987 = vmatprep.subr.bf16.mxu0 0
        %988 = vmatpush1.bf16.msra.mxu0 %v969
        %989 = vmatprep.subr.bf16.mxu0 0
        %990 = vmatpush1.bf16.msra.mxu0 %v970
        %991 = vmatprep.subr.bf16.mxu0 0
        %992 = vmatpush1.bf16.msra.mxu0 %v971
        %993 = vmatprep.subr.bf16.mxu0 0
        %994 = vmatpush1.bf16.msra.mxu0 %v972
        %995 = vmatprep.subr.bf16.mxu0 0
        %996 = vmatpush1.bf16.msra.mxu0 %v973
        %997 = vmatprep.subr.bf16.mxu0 0
        %998 = vmatpush1.bf16.msra.mxu0 %v974
        %999 = vmatprep.subr.bf16.mxu0 0
        %1000 = vmatpush1.bf16.msra.mxu0 0
        %1001 = vmatprep.subr.bf16.mxu0 0
        %1002 = vmatpush1.bf16.msra.mxu0 0
        %1003 = vmatprep.subr.bf16.mxu0 0
        %1004 = vmatpush1.bf16.msra.mxu0 0
        %1005 = vmatprep.subr.bf16.mxu0 0
        %1006 = vmatpush1.bf16.msra.mxu0 0
        %1007 = vmatprep.subr.bf16.mxu0 0
        %1008 = vmatpush1.bf16.msra.mxu0 0
        %1009 = vmatprep.subr.bf16.mxu0 0
        %1010 = vmatpush1.bf16.msra.mxu0 0
        %1011 = vmatprep.subr.bf16.mxu0 0
        %1012 = vmatpush1.bf16.msra.mxu0 0
        %1013 = vmatprep.subr.bf16.mxu0 0
        %1014 = vmatpush1.bf16.msra.mxu0 0
        %1015 = vmatprep.mubr.bf16.mxu0 0
        %1016 = vmatmul.mubr.bf16.gmra.mrb[0].mxu0 %v911
        %v1017 = vpop.f32.mrb[0].mxu0
        %v1018 = vadd.f32 %v933, %v1017
        %v1019 = vpop.f32.mrb[0].mxu0
        %v1020 = vpop.f32.mrb[0].mxu0
        %v1021 = vadd.f32 %v933, %v1020
        %v1022 = vpop.f32.mrb[0].mxu0
        %1023 = vdwg.mxu0
        %v1024 = vmax.f32 %v1018, 0.0
        %v1025 = vmax.f32 %v1021, 0.0
        %v1026 = vpack.c.bf16 %v1025, %v1024
        %v1027 = vld [vmem:[%s9] sm:$0xf]
        %v1028 = vld [vmem:[%s9 + $0x4] sm:$0xf]
        %v1029 = vld [vmem:[%s9 + $0x8] sm:$0xf]
        %v1030 = vld [vmem:[%s9 + $0xc] sm:$0xf]
        %v1031 = vld [vmem:[%s9 + $0x10] sm:$0xf]
        %v1032 = vld [vmem:[%s9 + $0x14] sm:$0xf]
        %v1033 = vld [vmem:[%s9 + $0x18] sm:$0xf]
        %v1034 = vld [vmem:[%s9 + $0x1c] sm:$0xf]
        %v1035 = vld [vmem:[%s9 + $0x20] sm:$0xf]
        %v1036 = vld [vmem:[%s9 + $0x24] sm:$0xf]
        %v1037 = vld [vmem:[%s9 + $0x28] sm:$0xf]
        %v1038 = vld [vmem:[%s9 + $0x2c] sm:$0xf]
        %v1039 = vld [vmem:[%s9 + $0x30] sm:$0xf]
        %v1040 = vld [vmem:[%s9 + $0x34] sm:$0xf]
        %v1041 = vld [vmem:[%s9 + $0x38] sm:$0xf]
        %v1042 = vld [vmem:[%s9 + $0x3c] sm:$0xf]
        %v1043 = vld [vmem:[%s10] sm:$0x1]
        %v1045 = vlaneseq
        %v1046 = vshrl.u32 %v1045, 7
        %v1047 = vsub.s32 0, %v1046
        %v1048 = vrot.slane %v1043, %v1047
        %v1066 = vunpack.c.l.b16 %v1027
        %v1067 = vunpack.c.l.b16 %v1028
        %v1068 = vunpack.c.l.b16 %v1029
        %v1069 = vunpack.c.l.b16 %v1030
        %v1070 = vunpack.c.l.b16 %v1031
        %v1071 = vunpack.c.l.b16 %v1032
        %v1072 = vunpack.c.l.b16 %v1033
        %v1073 = vunpack.c.l.b16 %v1034
        %v1074 = vunpack.c.l.b16 %v1035
        %v1075 = vunpack.c.l.b16 %v1036
        %v1076 = vunpack.c.l.b16 %v1037
        %v1077 = vunpack.c.l.b16 %v1038
        %v1078 = vunpack.c.l.b16 %v1039
        %v1079 = vunpack.c.l.b16 %v1040
        %v1080 = vunpack.c.l.b16 %v1041
        %v1081 = vunpack.c.l.b16 %v1042
        %v1082 = vpack.c.b16 %v1067, %v1066
        %v1083 = vpack.c.b16 %v1069, %v1068
        %v1084 = vpack.c.b16 %v1071, %v1070
        %v1085 = vpack.c.b16 %v1073, %v1072
        %v1086 = vpack.c.b16 %v1075, %v1074
        %v1087 = vpack.c.b16 %v1077, %v1076
        %v1088 = vpack.c.b16 %v1079, %v1078
        %v1089 = vpack.c.b16 %v1081, %v1080
        %1098 = vmatprep.subr.bf16.mxu0 0
        %1099 = vmatpush1.bf16.msra.mxu0 %v1082
        %1100 = vmatprep.subr.bf16.mxu0 0
        %1101 = vmatpush1.bf16.msra.mxu0 %v1083
        %1102 = vmatprep.subr.bf16.mxu0 0
        %1103 = vmatpush1.bf16.msra.mxu0 %v1084
        %1104 = vmatprep.subr.bf16.mxu0 0
        %1105 = vmatpush1.bf16.msra.mxu0 %v1085
        %1106 = vmatprep.subr.bf16.mxu0 0
        %1107 = vmatpush1.bf16.msra.mxu0 %v1086
        %1108 = vmatprep.subr.bf16.mxu0 0
        %1109 = vmatpush1.bf16.msra.mxu0 %v1087
        %1110 = vmatprep.subr.bf16.mxu0 0
        %1111 = vmatpush1.bf16.msra.mxu0 %v1088
        %1112 = vmatprep.subr.bf16.mxu0 0
        %1113 = vmatpush1.bf16.msra.mxu0 %v1089
        %1114 = vmatprep.subr.bf16.mxu0 0
        %1115 = vmatpush1.bf16.msra.mxu0 0
        %1116 = vmatprep.subr.bf16.mxu0 0
        %1117 = vmatpush1.bf16.msra.mxu0 0
        %1118 = vmatprep.subr.bf16.mxu0 0
        %1119 = vmatpush1.bf16.msra.mxu0 0
        %1120 = vmatprep.subr.bf16.mxu0 0
        %1121 = vmatpush1.bf16.msra.mxu0 0
        %1122 = vmatprep.subr.bf16.mxu0 0
        %1123 = vmatpush1.bf16.msra.mxu0 0
        %1124 = vmatprep.subr.bf16.mxu0 0
        %1125 = vmatpush1.bf16.msra.mxu0 0
        %1126 = vmatprep.subr.bf16.mxu0 0
        %1127 = vmatpush1.bf16.msra.mxu0 0
        %1128 = vmatprep.subr.bf16.mxu0 0
        %1129 = vmatpush1.bf16.msra.mxu0 0
        %1130 = vmatprep.mubr.bf16.mxu0 0
        %1131 = vmatmul.mubr.bf16.gmra.mrb[0].mxu0 %v1026
        %v1132 = vpop.f32.mrb[0].mxu0
        %v1133 = vadd.f32 %v1048, %v1132
        %v1134 = vpop.f32.mrb[0].mxu0
        %v1135 = vpop.f32.mrb[0].mxu0
        %v1136 = vadd.f32 %v1048, %v1135
        %v1137 = vpop.f32.mrb[0].mxu0
        %1138 = vdwg.mxu0
        %v1139 = vadd.f32 %v1133, %v905
        %v1140 = vadd.f32 %v1136, %v908
        %v1141 = vlaneseq
        %v1142 = vand.u32 %v1141, 127
        %vm1143 = vcmp.lt.s32.totalorder %v1142, 32
        %v1144 = vsel %vm1143, 1, 0
        %v1145 = vcvt.s32.f32 %v1144
        %1146 = vadd.xlane.f32.xlu0 %v1139
        %v1147 = vpop.xlane.xlu0 %1146
        %1148 = vadd.xlane.f32.xlu0 %v1140
        %v1149 = vpop.xlane.xlu0 %1148
        %v1150 = vmul.f32 %v1147, 0.03125
        %v1151 = vmul.f32 %v1149, 0.03125
        %v1152 = vsub.f32 %v1139, %v1150
        %v1153 = vsub.f32 %v1140, %v1151
        %v1154 = vmul.f32 %v1152, %v1145
        %v1155 = vmul.f32 %v1153, %v1145
        %v1156 = vmul.f32 %v1154, %v1154
        %v1157 = vmul.f32 %v1155, %v1155
        %1158 = vadd.xlane.f32.xlu0 %v1156
        %v1159 = vpop.xlane.xlu0 %1158
        %1160 = vadd.xlane.f32.xlu0 %v1157
        %v1161 = vpop.xlane.xlu0 %1160
        %v1162 = vmul.f32 %v1159, 0.03125
        %v1163 = vmul.f32 %v1161, 0.03125
        %v1164 = vadd.f32 %v1162, 1e-05
        %v1165 = vadd.f32 %v1163, 1e-05
        %v1166 = vrsqrt.pop %v1164
        %v1167 = vrsqrt.pop %v1165
        %v1168 = vmul.f32 %v1154, %v1166
        %v1169 = vmul.f32 %v1155, %v1167
        %v1170 = vld [vmem:[%s11] sm:$0x1]
        %v1172 = vlaneseq
        %v1173 = vshrl.u32 %v1172, 7
        %v1174 = vsub.s32 0, %v1173
        %v1175 = vrot.slane %v1170, %v1174
        %v1177 = vmul.f32 %v1168, %v1175
        %v1178 = vmul.f32 %v1169, %v1175
        %v1179 = vld [vmem:[%s12] sm:$0x1]
        %v1181 = vlaneseq
        %v1182 = vshrl.u32 %v1181, 7
        %v1183 = vsub.s32 0, %v1182
        %v1184 = vrot.slane %v1179, %v1183
        %v1186 = vadd.f32 %v1177, %v1184
        %v1187 = vadd.f32 %v1178, %v1184
        %1188 = vst [vmem:[%s487] sm:$0xff] %v1186
        %1189 = vst [vmem:[%s487 + $0x8] sm:$0xff] %v1187
        %s1190 = sand.u32 %s325, 1
        %s1191 = scalar_lea.sflag [#allocation4], %s1190
        %s1192 = sand.u32 %s325, 1
        %s1193 = smul.addr %s1192, 16
        %s1194 = scalar_lea.vmem [#allocation7], %s1193
        // Predicated region
        $region81: #{tpu_custom_call.1} parent=71 // pred_check
          %p1195 = pneg %p335
        $region82: #{tpu_custom_call.1} parent=71 // pred_check_branch
          %1197 = sbr.rel (%p1195) target = $region84
        $region83: #{tpu_custom_call.1} parent=71 // pred_region
          %s1199 = ssub.s32 256, 256
          %1200 = vsyncadd %s1191, %s1199
          %s1201 = smul.addr %s29, 2
          %s1202 = smul.addr %s1201, 128
          %s1203 = scalar_lea.hbm %s13, %s1202
          %s1204 = sshll.u32 %s1194, 4
          %s1205 = int_to_ptr.vmem [resolvable:$true] %s1204
          %1210 = dma.vmem_to_hbm [thread:$0]  %s1205, 256, %s1203, %s1191, 128, 128, 8
        $region84: #{tpu_custom_call.1} parent=71 // pred_fallthru
          _
      $region72: #{tpu_custom_call.1} parent=5 // pred_fallthru
        _
      %p1211 = scmp.le.s32.totalorder 2, %s24
      // Predicated region
      $region85: #{tpu_custom_call.1} parent=5 // pred_check
        %p1212 = pneg %p1211
      $region86: #{tpu_custom_call.1} parent=5 // pred_check_branch
        %1214 = sbr.rel (%p1212) target = $region88
      $region87: #{tpu_custom_call.1} parent=5 // pred_region
        %s1215 = ssub.s32 %s24, 2
        // Predicated region
        $region89: #{tpu_custom_call.1} parent=87 // pred_check
          %p1216 = pneg %p341
        $region90: #{tpu_custom_call.1} parent=87 // pred_check_branch
          %1218 = sbr.rel (%p1216) target = $region92
        $region91: #{tpu_custom_call.1} parent=87 // pred_region
          %s1219 = sand.u32 %s326, 1
          %s1220 = scalar_lea.sflag [#allocation4], %s1219
          %s1221 = sand.u32 %s326, 1
          %s1222 = smul.addr %s1221, 16
          %s1223 = scalar_lea.vmem [#allocation7], %s1222
          %1224 = dma.done %s1220, 256
        $region92: #{tpu_custom_call.1} parent=87 // pred_fallthru
          _
      $region88: #{tpu_custom_call.1} parent=5 // pred_fallthru
        _
    $region6: #{tpu_custom_call.1} parent=1 // loop_footer
      %s28 = sadd.s32 1, %s24
    $region7: #{tpu_custom_call.1} parent=1 // loop_footer_branch
      %23 = sbr.rel target = $region3
    $region8: #{tpu_custom_call.1} parent=1 // loop_exit
      _
    %1225 = vsyncpa [#allocation3], 1
    %s1226 = scalar_lea.sflag [#allocation3], 1
    %1227 = vsyncpa %s1226, 1
    %1228 = vsyncpa [#allocation6], 1
    %1229 = vsyncpa [#allocation4], 1
    %s1230 = scalar_lea.sflag [#allocation4], 1
    %1231 = vsyncpa %s1230, 1

</llo_original>
